<compile_context>
chip_gen: v6e
topology: v6e:2x2x1
jax: 0.10.0
libtpu: 0.0.40
codegen_flags: <defaults>
</compile_context>

<pallas_src>
import functools

import jax
import jax.numpy as jnp
from jax import lax
from jax.experimental import pallas as pl
from jax.experimental.pallas import tpu as pltpu


# ---------------------------------------------------------------------------
# Kernel
# ---------------------------------------------------------------------------
def _panel_scores(qp_panel, cp_panel, ws_ref, *, use_static):
    """Additive-attention scores for one (rows, cols) panel, h innermost.

    qp_panel : (rw, H)  query projection rows   (tanh compute dtype)
    cp_panel : (H, cw)  context projection rows (tanh compute dtype, transposed)
    returns  : (rw, cw) float32
    """
    rw = qp_panel.shape[0]
    hdim, cw = cp_panel.shape

    def contrib(h, q_col, c_row):
        t = jnp.tanh(q_col + c_row)                       # (rw, cw) on the EUP
        return ws_ref[0, h] * t.astype(jnp.float32)       # SMEM scalar * vec FMA

    if use_static:
        acc = jnp.zeros((rw, cw), jnp.float32)
        for h in range(hdim):
            acc = acc + contrib(h, qp_panel[:, h:h + 1], cp_panel[h:h + 1, :])
        return acc

    # Large H: bound trace size with a fori_loop over 8-wide h blocks; the
    # static unroll inside each block keeps the EUP pipeline full.
    HB = 8
    qp_t = qp_panel.T                                     # (H, rw): sublane-sliceable

    def body(b, acc):
        h0 = pl.multiple_of(b * HB, HB)
        q_blk = lax.dynamic_slice_in_dim(qp_t, h0, HB, axis=0).T     # (rw, HB)
        c_blk = lax.dynamic_slice_in_dim(cp_panel, h0, HB, axis=0)   # (HB, cw)
        for u in range(HB):
            acc = acc + contrib(h0 + u, q_blk[:, u:u + 1], c_blk[u:u + 1, :])
        return acc

    acc = lax.fori_loop(0, hdim // HB, body, jnp.zeros((rw, cw), jnp.float32))
    for h in range((hdim // HB) * HB, hdim):              # static remainder
        acc = acc + contrib(h, qp_panel[:, h:h + 1], cp_panel[h:h + 1, :])
    return acc


def _cross_attention_kernel(q_ref, c_ref, cpt_ref, wq_ref, bq_ref, ws_ref, bs_ref,
                            o_ref, scores_ref, *, panel_rows, panel_cols,
                            h_unroll_limit, stmt_limit):
    q = q_ref[0]              # (tq, Dq)   bf16 on the fast path
    ctx = c_ref[0]            # (Lc, Dcp)  bf16 on the fast path, lane-padded Dc
    cp_t = cpt_ref[0]         # (H, Lc)    hoisted 2*context_proj (tanh dtype)
    tq = q.shape[0]
    lc = ctx.shape[0]
    hdim = cp_t.shape[0]
    cdt = cp_t.dtype

    # Query projection on the MXU, f32 accumulation.  The context projection is
    # precomputed in the wrapper, so nothing is recomputed per qi step.
    qp = jnp.dot(q, wq_ref[...], preferred_element_type=jnp.float32) + bq_ref[...]
    qp_c = qp.astype(cdt)                                 # (tq, H)

    bias_s = bs_ref[0, 0]

    # Fused additive-attention scores, panel-by-panel, h innermost.  Panels are
    # register-sized so the per-panel accumulator stays in vregs across the H
    # loop instead of re-loading/re-storing the full (tq, Lc) accumulator per h.
    row_starts = list(range(0, tq, panel_rows))
    col_starts = list(range(0, lc, panel_cols))
    q_panels = [qp_c[r:r + min(panel_rows, tq - r), :] for r in row_starts]
    n_panels = len(row_starts) * len(col_starts)
    use_static = (hdim <= h_unroll_limit) and (n_panels * hdim <= stmt_limit)

    for c0 in col_starts:
        cw = min(panel_cols, lc - c0)
        cp_panel = cp_t[:, c0:c0 + cw]                    # (H, cw)
        for r0, qp_panel in zip(row_starts, q_panels):
            rw = qp_panel.shape[0]
            acc = _panel_scores(qp_panel, cp_panel, ws_ref, use_static=use_static)
            scores_ref[r0:r0 + rw, c0:c0 + cw] = acc + bias_s

    # Numerically-stable softmax over the context (lane) axis; normalization is
    # applied AFTER the PV matmul (tq*Dc multiplies, exact divide).
    scores = scores_ref[...]                              # (tq, Lc) f32
    m = jnp.max(scores, axis=-1, keepdims=True)
    e = jnp.exp(scores - m)
    l = jnp.sum(e, axis=-1, keepdims=True)
    pv = jnp.dot(e.astype(ctx.dtype), ctx, preferred_element_type=jnp.float32)
    o_ref[0] = (pv * (1.0 / l)).astype(o_ref.dtype)


# ---------------------------------------------------------------------------
# Wrapper
# ---------------------------------------------------------------------------
def _device_info():
    try:
        kind = jax.devices()[0].device_kind.lower()
    except Exception:
        kind = ""
    is_v7 = ("v7" in kind) or ("tpu7" in kind)
    has_bf16_vpu = is_v7 or ("v6" in kind) or ("trillium" in kind)
    vmem_phys = (64 if is_v7 else 128) * 1024 * 1024
    return is_v7, has_bf16_vpu, vmem_phys


def _round_up(x, m):
    return ((x + m - 1) // m) * m


def _pick_q_tile(lq, cap, est_fn, budget):
    cands = [t for t in (512, 256, 128, 64, 32, 16, 8) if t <= cap and lq % t == 0]
    if not cands:
        return lq
    for t in cands:
        if est_fn(t) <= budget:
            return t
    return cands[-1]


def cross_attention(query, context, params, *, use_bf16_matmul=True,
                    use_bf16_tanh=None, q_tile=None,
                    panel_rows=16, panel_cols=512,
                    h_unroll_limit=128, stmt_limit=4096):
    """query: (B, Lq, Dq) f32, context: (B, Lc, Dc) f32 -> (B, Lq, Dc) f32."""
    B, Lq, Dq = query.shape
    Bc, Lc, Dc = context.shape
    assert B == Bc, "query/context batch mismatch"
    wq, bq, wc, bc, ws, bs = params   # wq:(Dq,H) bq:(1,H) wc:(Dc,H) bc:(1,H) ws:(1,H) bs:(1,1)
    H = wq.shape[1]

    is_v7, has_bf16_vpu, vmem_phys = _device_info()
    if use_bf16_tanh is None:
        use_bf16_tanh = has_bf16_vpu                      # auto: v6e / v7x only
    use_bf16_tanh = bool(use_bf16_tanh) and has_bf16_vpu  # never on v5e / older

    mm_dtype = jnp.bfloat16 if use_bf16_matmul else jnp.float32
    tanh_dtype = jnp.bfloat16 if use_bf16_tanh else jnp.float32
    in_isz = jnp.dtype(mm_dtype).itemsize
    t_isz = jnp.dtype(tanh_dtype).itemsize

    # -- Hoisted context projection (once per call, qi-invariant).  The double
    #    add of context_proj in the reference is folded into 2*wc / 2*bc.
    prec = None if use_bf16_matmul else lax.Precision.HIGHEST
    cp2 = jnp.einsum("bld,dh->blh", context, wc * 2.0, precision=prec) + (bc * 2.0)
    cp2t = jnp.swapaxes(cp2, 1, 2).astype(tanh_dtype)     # (B, H, Lc)

    # -- Lane-dense output: pad Dc to a multiple of 128 (unmasked vst); the pad
    #    columns are zero so they contribute nothing and are sliced off below.
    Dcp = Dc if Dc % 128 == 0 else _round_up(Dc, 128)
    ctx_in = context if Dcp == Dc else jnp.pad(context, ((0, 0), (0, 0), (0, Dcp - Dc)))
    ctx_in = ctx_in.astype(mm_dtype)
    q_in = query.astype(mm_dtype)
    wq_in = wq.astype(mm_dtype)

    # -- Generation-aware residency: on v7x (64 MiB VMEM) large qi-invariant
    #    blocks are single-buffered to reclaim VMEM for compute tiles.
    def _resident_block(shape, index_map, nbytes):
        if is_v7 and nbytes > (2 << 20):
            return pl.BlockSpec(shape, index_map, pipeline_mode=pl.Buffered(1))
        return pl.BlockSpec(shape, index_map)

    ctx_bufs = 1 if (is_v7 and Lc * Dcp * in_isz > (2 << 20)) else 2
    cpt_bufs = 1 if (is_v7 and H * Lc * t_isz > (2 << 20)) else 2

    def _est(tq):
        f32 = 4
        return int(2 * tq * Dq * in_isz                  # query blocks (2 buffers)
                   + ctx_bufs * Lc * Dcp * in_isz        # resident context
                   + cpt_bufs * H * Lc * t_isz           # resident context projection
                   + 2 * tq * Dcp * f32                  # output blocks
                   + 2 * (Dq * H * in_isz + H * f32)     # weight blocks
                   + tq * Lc * f32                       # scores scratch
                   + tq * H * (f32 + t_isz)              # qp (+ cast copy)
                   + 3 * tq * Lc * f32                   # exp / softmax temporaries
                   + 2 * tq * Dcp * f32)                 # pv / out

    tq_cap = 256 if is_v7 else 512
    budget = int(0.6 * vmem_phys)
    tq = q_tile if q_tile is not None else _pick_q_tile(Lq, tq_cap, _est, budget)
    if Lq % tq:
        tq = Lq
    need = _est(tq)
    if need > int(0.9 * vmem_phys):
        # TODO(synk): Lc tiling with online-softmax accumulation for long contexts.
        raise ValueError(
            f"CrossAttention working set ~{need >> 20} MiB exceeds VMEM "
            f"(~{vmem_phys >> 20} MiB) for Lc={Lc}; Lc tiling not implemented.")
    vmem_limit = int(min(max(1.5 * need, 16 * 1024 * 1024),
                         vmem_phys - 8 * 1024 * 1024))

    grid = (B, Lq // tq)

    kernel = functools.partial(_cross_attention_kernel,
                               panel_rows=min(panel_rows, tq),
                               panel_cols=min(panel_cols, Lc),
                               h_unroll_limit=h_unroll_limit,
                               stmt_limit=stmt_limit)

    in_specs = [
        pl.BlockSpec((1, tq, Dq), lambda b, qi: (b, qi, 0)),             # query tile
        _resident_block((1, Lc, Dcp), lambda b, qi: (b, 0, 0),
                        Lc * Dcp * in_isz),                              # context
        _resident_block((1, H, Lc), lambda b, qi: (b, 0, 0),
                        H * Lc * t_isz),                                 # 2*ctx proj (T)
        pl.BlockSpec((Dq, H), lambda b, qi: (0, 0)),                     # wq
        pl.BlockSpec((1, H), lambda b, qi: (0, 0)),                      # bq
        pl.BlockSpec(memory_space=pltpu.MemorySpace.SMEM),               # ws
        pl.BlockSpec(memory_space=pltpu.MemorySpace.SMEM),               # bs
    ]
    out_specs = pl.BlockSpec((1, tq, Dcp), lambda b, qi: (b, qi, 0))

    out = pl.pallas_call(
        kernel,
        out_shape=jax.ShapeDtypeStruct((B, Lq, Dcp), jnp.float32),
        grid_spec=pltpu.PrefetchScalarGridSpec(
            num_scalar_prefetch=0,
            grid=grid,
            in_specs=in_specs,
            out_specs=out_specs,
            scratch_shapes=[pltpu.VMEM((tq, Lc), jnp.float32)],
        ),
        compiler_params=pltpu.CompilerParams(
            dimension_semantics=("parallel", "parallel"),
            vmem_limit_bytes=vmem_limit),
    )(q_in, ctx_in, cp2t, wq_in, bq, ws, bs)

    return out if Dcp == Dc else out[..., :Dc]


# ---------------------------------------------------------------------------
# Params / reference
# ---------------------------------------------------------------------------
def init_params(key, query_dim, context_dim, hidden_dim):
    """Deterministic synthetic init.  Weights are stored pre-transposed
    (in_dim, out_dim) so the kernel does x @ W directly (PyTorch does x @ W.T)."""
    k1, k2, k3, k4, k5, k6 = jax.random.split(key, 6)
    s = 0.05
    wq = (s * jax.random.normal(k1, (query_dim, hidden_dim))).astype(jnp.float32)
    bq = (s * jax.random.normal(k2, (1, hidden_dim))).astype(jnp.float32)
    wc = (s * jax.random.normal(k3, (context_dim, hidden_dim))).astype(jnp.float32)
    bc = (s * jax.random.normal(k4, (1, hidden_dim))).astype(jnp.float32)
    ws = (s * jax.random.normal(k5, (1, hidden_dim))).astype(jnp.float32)
    bs = (s * jax.random.normal(k6, (1, 1))).astype(jnp.float32)
    return wq, bq, wc, bc, ws, bs


def cross_attention_ref(query, context, params):
    """Pure-JAX reference mirroring the PyTorch forward exactly (f32 HIGHEST)."""
    wq, bq, wc, bc, ws, bs = params
    hi = lax.Precision.HIGHEST
    qp = jnp.einsum("bqd,dh->bqh", query, wq, precision=hi) + bq
    cp = jnp.einsum("bld,dh->blh", context, wc, precision=hi) + bc
    kk = qp[:, :, None, :] + cp[:, None, :, :] + cp[:, None, :, :]
    scores = jnp.einsum("bqlh,h->bql", jnp.tanh(kk), ws[0], precision=hi) + bs[0, 0]
    attn = jax.nn.softmax(scores, axis=-1)
    return jnp.einsum("bql,bld->bqd", attn, context, precision=hi)


if __name__ == "__main__":
    B, Lq, Lc = 2, 8, 8
    query_dim, context_dim, hidden_dim = 16, 16, 32

    key = jax.random.PRNGKey(0)
    kq, kc, kp = jax.random.split(key, 3)
    query = jax.random.normal(kq, (B, Lq, query_dim), dtype=jnp.float32)
    context = jax.random.normal(kc, (B, Lc, context_dim), dtype=jnp.float32)
    params = init_params(kp, query_dim, context_dim, hidden_dim)

    ref = cross_attention_ref(query, context, params)

    # Exact path: f32 matmuls + f32 tanh + exact softmax divide (tight check).
    out_exact = jax.block_until_ready(
        cross_attention(query, context, params,
                        use_bf16_matmul=False, use_bf16_tanh=False))
    assert out_exact.shape == (B, Lq, context_dim)
    assert jnp.allclose(out_exact, ref, atol=2e-4, rtol=2e-4), "exact path mismatch"

    # Default fast path: bf16 MXU operands (f32 accumulation), bf16 tanh
    # auto-enabled on v6e/v7x.  Tolerance reflects bf16 operand rounding.
    out_fast = jax.block_until_ready(cross_attention(query, context, params))
    assert out_fast.shape == (B, Lq, context_dim)
    assert jnp.allclose(out_fast, ref, atol=5e-3, rtol=1e-2), "fast path mismatch"

    print("KERNEL_OK")
</pallas_src>

<mosaic_0001>
module attributes {stable_mosaic.version = 11 : i64} {
  func.func @_cross_attention_kernel(%arg0: i32, %arg1: i32, %arg2: memref<1x8x16xf32, #tpu.memory_space<vmem>>, %arg3: memref<1x8x128xf32, #tpu.memory_space<vmem>>, %arg4: memref<1x32x8xf32, #tpu.memory_space<vmem>>, %arg5: memref<16x32xf32, #tpu.memory_space<vmem>>, %arg6: memref<1x32xf32, #tpu.memory_space<vmem>>, %arg7: memref<1x32xf32, #tpu.memory_space<smem>>, %arg8: memref<1x1xf32, #tpu.memory_space<smem>>, %arg9: memref<1x8x128xf32, #tpu.memory_space<vmem>>, %arg10: memref<8x8xf32, #tpu.memory_space<vmem>>) attributes {dimension_semantics = [#tpu.dimension_semantics<parallel>, #tpu.dimension_semantics<parallel>], iteration_bounds = array<i64: 2, 1>, scalar_prefetch = 0 : i64, scratch_operands = 1 : i64, tpu.core_type = #tpu.core_type<tc>, window_params = [{transform_indices = @transform_0, window_bounds = array<i64: 1, 8, 16>}, {transform_indices = @transform_1, window_bounds = array<i64: 1, 8, 128>}, {transform_indices = @transform_2, window_bounds = array<i64: 1, 32, 8>}, {pipeline_mode = #tpu.pipeline_mode<synchronous>, transform_indices = @transform_3, window_bounds = array<i64: 16, 32>}, {pipeline_mode = #tpu.pipeline_mode<synchronous>, transform_indices = @transform_4, window_bounds = array<i64: 1, 32>}, {transform_indices = @transform_5, window_bounds = array<i64: 1, 32>}, {transform_indices = @transform_6, window_bounds = array<i64: 1, 1>}, {transform_indices = @transform_7, window_bounds = array<i64: 1, 8, 128>}]} {
    %c0 = arith.constant 0 : index
    %c0_0 = arith.constant 0 : index
    %c0_1 = arith.constant 0 : index
    %0 = vector.load %arg2[%c0, %c0_0, %c0_1] : memref<1x8x16xf32, #tpu.memory_space<vmem>>, vector<1x8x16xf32>
    %1 = vector.shape_cast %0 : vector<1x8x16xf32> to vector<8x16xf32>
    %c0_2 = arith.constant 0 : index
    %c0_3 = arith.constant 0 : index
    %c0_4 = arith.constant 0 : index
    %2 = vector.load %arg3[%c0_2, %c0_3, %c0_4] : memref<1x8x128xf32, #tpu.memory_space<vmem>>, vector<1x8x128xf32>
    %3 = vector.shape_cast %2 : vector<1x8x128xf32> to vector<8x128xf32>
    %c0_5 = arith.constant 0 : index
    %c0_6 = arith.constant 0 : index
    %c0_7 = arith.constant 0 : index
    %4 = vector.load %arg4[%c0_5, %c0_6, %c0_7] : memref<1x32x8xf32, #tpu.memory_space<vmem>>, vector<1x32x8xf32>
    %5 = vector.shape_cast %4 : vector<1x32x8xf32> to vector<32x8xf32>
    %c0_8 = arith.constant 0 : index
    %c0_9 = arith.constant 0 : index
    %6 = vector.load %arg5[%c0_8, %c0_9] : memref<16x32xf32, #tpu.memory_space<vmem>>, vector<16x32xf32>
    %cst = arith.constant dense<0.000000e+00> : vector<8x32xf32>
    %7 = tpu.matmul %1, %6, %cst {dimension_numbers = #tpu.dot_dimension_numbers<[1], [0], [0], [1], [0, 0, 1, 1], [], []>} : vector<8x16xf32>, vector<16x32xf32>, vector<8x32xf32> -> vector<8x32xf32>
    %c0_10 = arith.constant 0 : index
    %c0_11 = arith.constant 0 : index
    %8 = vector.load %arg6[%c0_10, %c0_11] : memref<1x32xf32, #tpu.memory_space<vmem>>, vector<1x32xf32>
    %9 = vector.broadcast %8 : vector<1x32xf32> to vector<8x32xf32>
    %10 = arith.addf %7, %9 : vector<8x32xf32>
    %c0_12 = arith.constant 0 : index
    %c0_13 = arith.constant 0 : index
    %11 = memref.load %arg8[%c0_12, %c0_13] : memref<1x1xf32, #tpu.memory_space<smem>>
    %cst_14 = arith.constant 0.000000e+00 : f32
    %12 = vector.broadcast %cst_14 : f32 to vector<8x8xf32>
    %13 = vector.extract_strided_slice %10 {offsets = [0, 0], sizes = [8, 1], strides = [1, 1]} : vector<8x32xf32> to vector<8x1xf32>
    %14 = vector.extract_strided_slice %5 {offsets = [0, 0], sizes = [1, 8], strides = [1, 1]} : vector<32x8xf32> to vector<1x8xf32>
    %15 = vector.broadcast %13 : vector<8x1xf32> to vector<8x8xf32>
    %16 = vector.broadcast %14 : vector<1x8xf32> to vector<8x8xf32>
    %17 = arith.addf %15, %16 : vector<8x8xf32>
    %18 = math.tanh %17 : vector<8x8xf32>
    %c0_15 = arith.constant 0 : index
    %c0_16 = arith.constant 0 : index
    %19 = memref.load %arg7[%c0_15, %c0_16] : memref<1x32xf32, #tpu.memory_space<smem>>
    %20 = vector.broadcast %19 : f32 to vector<8x8xf32>
    %21 = arith.mulf %20, %18 : vector<8x8xf32>
    %22 = arith.addf %12, %21 : vector<8x8xf32>
    %23 = vector.extract_strided_slice %10 {offsets = [0, 1], sizes = [8, 1], strides = [1, 1]} : vector<8x32xf32> to vector<8x1xf32>
    %24 = vector.extract_strided_slice %5 {offsets = [1, 0], sizes = [1, 8], strides = [1, 1]} : vector<32x8xf32> to vector<1x8xf32>
    %25 = vector.broadcast %23 : vector<8x1xf32> to vector<8x8xf32>
    %26 = vector.broadcast %24 : vector<1x8xf32> to vector<8x8xf32>
    %27 = arith.addf %25, %26 : vector<8x8xf32>
    %28 = math.tanh %27 : vector<8x8xf32>
    %c0_17 = arith.constant 0 : index
    %c1 = arith.constant 1 : index
    %29 = memref.load %arg7[%c0_17, %c1] : memref<1x32xf32, #tpu.memory_space<smem>>
    %30 = vector.broadcast %29 : f32 to vector<8x8xf32>
    %31 = arith.mulf %30, %28 : vector<8x8xf32>
    %32 = arith.addf %22, %31 : vector<8x8xf32>
    %33 = vector.extract_strided_slice %10 {offsets = [0, 2], sizes = [8, 1], strides = [1, 1]} : vector<8x32xf32> to vector<8x1xf32>
    %34 = vector.extract_strided_slice %5 {offsets = [2, 0], sizes = [1, 8], strides = [1, 1]} : vector<32x8xf32> to vector<1x8xf32>
    %35 = vector.broadcast %33 : vector<8x1xf32> to vector<8x8xf32>
    %36 = vector.broadcast %34 : vector<1x8xf32> to vector<8x8xf32>
    %37 = arith.addf %35, %36 : vector<8x8xf32>
    %38 = math.tanh %37 : vector<8x8xf32>
    %c0_18 = arith.constant 0 : index
    %c2 = arith.constant 2 : index
    %39 = memref.load %arg7[%c0_18, %c2] : memref<1x32xf32, #tpu.memory_space<smem>>
    %40 = vector.broadcast %39 : f32 to vector<8x8xf32>
    %41 = arith.mulf %40, %38 : vector<8x8xf32>
    %42 = arith.addf %32, %41 : vector<8x8xf32>
    %43 = vector.extract_strided_slice %10 {offsets = [0, 3], sizes = [8, 1], strides = [1, 1]} : vector<8x32xf32> to vector<8x1xf32>
    %44 = vector.extract_strided_slice %5 {offsets = [3, 0], sizes = [1, 8], strides = [1, 1]} : vector<32x8xf32> to vector<1x8xf32>
    %45 = vector.broadcast %43 : vector<8x1xf32> to vector<8x8xf32>
    %46 = vector.broadcast %44 : vector<1x8xf32> to vector<8x8xf32>
    %47 = arith.addf %45, %46 : vector<8x8xf32>
    %48 = math.tanh %47 : vector<8x8xf32>
    %c0_19 = arith.constant 0 : index
    %c3 = arith.constant 3 : index
    %49 = memref.load %arg7[%c0_19, %c3] : memref<1x32xf32, #tpu.memory_space<smem>>
    %50 = vector.broadcast %49 : f32 to vector<8x8xf32>
    %51 = arith.mulf %50, %48 : vector<8x8xf32>
    %52 = arith.addf %42, %51 : vector<8x8xf32>
    %53 = vector.extract_strided_slice %10 {offsets = [0, 4], sizes = [8, 1], strides = [1, 1]} : vector<8x32xf32> to vector<8x1xf32>
    %54 = vector.extract_strided_slice %5 {offsets = [4, 0], sizes = [1, 8], strides = [1, 1]} : vector<32x8xf32> to vector<1x8xf32>
    %55 = vector.broadcast %53 : vector<8x1xf32> to vector<8x8xf32>
    %56 = vector.broadcast %54 : vector<1x8xf32> to vector<8x8xf32>
    %57 = arith.addf %55, %56 : vector<8x8xf32>
    %58 = math.tanh %57 : vector<8x8xf32>
    %c0_20 = arith.constant 0 : index
    %c4 = arith.constant 4 : index
    %59 = memref.load %arg7[%c0_20, %c4] : memref<1x32xf32, #tpu.memory_space<smem>>
    %60 = vector.broadcast %59 : f32 to vector<8x8xf32>
    %61 = arith.mulf %60, %58 : vector<8x8xf32>
    %62 = arith.addf %52, %61 : vector<8x8xf32>
    %63 = vector.extract_strided_slice %10 {offsets = [0, 5], sizes = [8, 1], strides = [1, 1]} : vector<8x32xf32> to vector<8x1xf32>
    %64 = vector.extract_strided_slice %5 {offsets = [5, 0], sizes = [1, 8], strides = [1, 1]} : vector<32x8xf32> to vector<1x8xf32>
    %65 = vector.broadcast %63 : vector<8x1xf32> to vector<8x8xf32>
    %66 = vector.broadcast %64 : vector<1x8xf32> to vector<8x8xf32>
    %67 = arith.addf %65, %66 : vector<8x8xf32>
    %68 = math.tanh %67 : vector<8x8xf32>
    %c0_21 = arith.constant 0 : index
    %c5 = arith.constant 5 : index
    %69 = memref.load %arg7[%c0_21, %c5] : memref<1x32xf32, #tpu.memory_space<smem>>
    %70 = vector.broadcast %69 : f32 to vector<8x8xf32>
    %71 = arith.mulf %70, %68 : vector<8x8xf32>
    %72 = arith.addf %62, %71 : vector<8x8xf32>
    %73 = vector.extract_strided_slice %10 {offsets = [0, 6], sizes = [8, 1], strides = [1, 1]} : vector<8x32xf32> to vector<8x1xf32>
    %74 = vector.extract_strided_slice %5 {offsets = [6, 0], sizes = [1, 8], strides = [1, 1]} : vector<32x8xf32> to vector<1x8xf32>
    %75 = vector.broadcast %73 : vector<8x1xf32> to vector<8x8xf32>
    %76 = vector.broadcast %74 : vector<1x8xf32> to vector<8x8xf32>
    %77 = arith.addf %75, %76 : vector<8x8xf32>
    %78 = math.tanh %77 : vector<8x8xf32>
    %c0_22 = arith.constant 0 : index
    %c6 = arith.constant 6 : index
    %79 = memref.load %arg7[%c0_22, %c6] : memref<1x32xf32, #tpu.memory_space<smem>>
    %80 = vector.broadcast %79 : f32 to vector<8x8xf32>
    %81 = arith.mulf %80, %78 : vector<8x8xf32>
    %82 = arith.addf %72, %81 : vector<8x8xf32>
    %83 = vector.extract_strided_slice %10 {offsets = [0, 7], sizes = [8, 1], strides = [1, 1]} : vector<8x32xf32> to vector<8x1xf32>
    %84 = vector.extract_strided_slice %5 {offsets = [7, 0], sizes = [1, 8], strides = [1, 1]} : vector<32x8xf32> to vector<1x8xf32>
    %85 = vector.broadcast %83 : vector<8x1xf32> to vector<8x8xf32>
    %86 = vector.broadcast %84 : vector<1x8xf32> to vector<8x8xf32>
    %87 = arith.addf %85, %86 : vector<8x8xf32>
    %88 = math.tanh %87 : vector<8x8xf32>
    %c0_23 = arith.constant 0 : index
    %c7 = arith.constant 7 : index
    %89 = memref.load %arg7[%c0_23, %c7] : memref<1x32xf32, #tpu.memory_space<smem>>
    %90 = vector.broadcast %89 : f32 to vector<8x8xf32>
    %91 = arith.mulf %90, %88 : vector<8x8xf32>
    %92 = arith.addf %82, %91 : vector<8x8xf32>
    %93 = vector.extract_strided_slice %10 {offsets = [0, 8], sizes = [8, 1], strides = [1, 1]} : vector<8x32xf32> to vector<8x1xf32>
    %94 = vector.extract_strided_slice %5 {offsets = [8, 0], sizes = [1, 8], strides = [1, 1]} : vector<32x8xf32> to vector<1x8xf32>
    %95 = vector.broadcast %93 : vector<8x1xf32> to vector<8x8xf32>
    %96 = vector.broadcast %94 : vector<1x8xf32> to vector<8x8xf32>
    %97 = arith.addf %95, %96 : vector<8x8xf32>
    %98 = math.tanh %97 : vector<8x8xf32>
    %c0_24 = arith.constant 0 : index
    %c8 = arith.constant 8 : index
    %99 = memref.load %arg7[%c0_24, %c8] : memref<1x32xf32, #tpu.memory_space<smem>>
    %100 = vector.broadcast %99 : f32 to vector<8x8xf32>
    %101 = arith.mulf %100, %98 : vector<8x8xf32>
    %102 = arith.addf %92, %101 : vector<8x8xf32>
    %103 = vector.extract_strided_slice %10 {offsets = [0, 9], sizes = [8, 1], strides = [1, 1]} : vector<8x32xf32> to vector<8x1xf32>
    %104 = vector.extract_strided_slice %5 {offsets = [9, 0], sizes = [1, 8], strides = [1, 1]} : vector<32x8xf32> to vector<1x8xf32>
    %105 = vector.broadcast %103 : vector<8x1xf32> to vector<8x8xf32>
    %106 = vector.broadcast %104 : vector<1x8xf32> to vector<8x8xf32>
    %107 = arith.addf %105, %106 : vector<8x8xf32>
    %108 = math.tanh %107 : vector<8x8xf32>
    %c0_25 = arith.constant 0 : index
    %c9 = arith.constant 9 : index
    %109 = memref.load %arg7[%c0_25, %c9] : memref<1x32xf32, #tpu.memory_space<smem>>
    %110 = vector.broadcast %109 : f32 to vector<8x8xf32>
    %111 = arith.mulf %110, %108 : vector<8x8xf32>
    %112 = arith.addf %102, %111 : vector<8x8xf32>
    %113 = vector.extract_strided_slice %10 {offsets = [0, 10], sizes = [8, 1], strides = [1, 1]} : vector<8x32xf32> to vector<8x1xf32>
    %114 = vector.extract_strided_slice %5 {offsets = [10, 0], sizes = [1, 8], strides = [1, 1]} : vector<32x8xf32> to vector<1x8xf32>
    %115 = vector.broadcast %113 : vector<8x1xf32> to vector<8x8xf32>
    %116 = vector.broadcast %114 : vector<1x8xf32> to vector<8x8xf32>
    %117 = arith.addf %115, %116 : vector<8x8xf32>
    %118 = math.tanh %117 : vector<8x8xf32>
    %c0_26 = arith.constant 0 : index
    %c10 = arith.constant 10 : index
    %119 = memref.load %arg7[%c0_26, %c10] : memref<1x32xf32, #tpu.memory_space<smem>>
    %120 = vector.broadcast %119 : f32 to vector<8x8xf32>
    %121 = arith.mulf %120, %118 : vector<8x8xf32>
    %122 = arith.addf %112, %121 : vector<8x8xf32>
    %123 = vector.extract_strided_slice %10 {offsets = [0, 11], sizes = [8, 1], strides = [1, 1]} : vector<8x32xf32> to vector<8x1xf32>
    %124 = vector.extract_strided_slice %5 {offsets = [11, 0], sizes = [1, 8], strides = [1, 1]} : vector<32x8xf32> to vector<1x8xf32>
    %125 = vector.broadcast %123 : vector<8x1xf32> to vector<8x8xf32>
    %126 = vector.broadcast %124 : vector<1x8xf32> to vector<8x8xf32>
    %127 = arith.addf %125, %126 : vector<8x8xf32>
    %128 = math.tanh %127 : vector<8x8xf32>
    %c0_27 = arith.constant 0 : index
    %c11 = arith.constant 11 : index
    %129 = memref.load %arg7[%c0_27, %c11] : memref<1x32xf32, #tpu.memory_space<smem>>
    %130 = vector.broadcast %129 : f32 to vector<8x8xf32>
    %131 = arith.mulf %130, %128 : vector<8x8xf32>
    %132 = arith.addf %122, %131 : vector<8x8xf32>
    %133 = vector.extract_strided_slice %10 {offsets = [0, 12], sizes = [8, 1], strides = [1, 1]} : vector<8x32xf32> to vector<8x1xf32>
    %134 = vector.extract_strided_slice %5 {offsets = [12, 0], sizes = [1, 8], strides = [1, 1]} : vector<32x8xf32> to vector<1x8xf32>
    %135 = vector.broadcast %133 : vector<8x1xf32> to vector<8x8xf32>
    %136 = vector.broadcast %134 : vector<1x8xf32> to vector<8x8xf32>
    %137 = arith.addf %135, %136 : vector<8x8xf32>
    %138 = math.tanh %137 : vector<8x8xf32>
    %c0_28 = arith.constant 0 : index
    %c12 = arith.constant 12 : index
    %139 = memref.load %arg7[%c0_28, %c12] : memref<1x32xf32, #tpu.memory_space<smem>>
    %140 = vector.broadcast %139 : f32 to vector<8x8xf32>
    %141 = arith.mulf %140, %138 : vector<8x8xf32>
    %142 = arith.addf %132, %141 : vector<8x8xf32>
    %143 = vector.extract_strided_slice %10 {offsets = [0, 13], sizes = [8, 1], strides = [1, 1]} : vector<8x32xf32> to vector<8x1xf32>
    %144 = vector.extract_strided_slice %5 {offsets = [13, 0], sizes = [1, 8], strides = [1, 1]} : vector<32x8xf32> to vector<1x8xf32>
    %145 = vector.broadcast %143 : vector<8x1xf32> to vector<8x8xf32>
    %146 = vector.broadcast %144 : vector<1x8xf32> to vector<8x8xf32>
    %147 = arith.addf %145, %146 : vector<8x8xf32>
    %148 = math.tanh %147 : vector<8x8xf32>
    %c0_29 = arith.constant 0 : index
    %c13 = arith.constant 13 : index
    %149 = memref.load %arg7[%c0_29, %c13] : memref<1x32xf32, #tpu.memory_space<smem>>
    %150 = vector.broadcast %149 : f32 to vector<8x8xf32>
    %151 = arith.mulf %150, %148 : vector<8x8xf32>
    %152 = arith.addf %142, %151 : vector<8x8xf32>
    %153 = vector.extract_strided_slice %10 {offsets = [0, 14], sizes = [8, 1], strides = [1, 1]} : vector<8x32xf32> to vector<8x1xf32>
    %154 = vector.extract_strided_slice %5 {offsets = [14, 0], sizes = [1, 8], strides = [1, 1]} : vector<32x8xf32> to vector<1x8xf32>
    %155 = vector.broadcast %153 : vector<8x1xf32> to vector<8x8xf32>
    %156 = vector.broadcast %154 : vector<1x8xf32> to vector<8x8xf32>
    %157 = arith.addf %155, %156 : vector<8x8xf32>
    %158 = math.tanh %157 : vector<8x8xf32>
    %c0_30 = arith.constant 0 : index
    %c14 = arith.constant 14 : index
    %159 = memref.load %arg7[%c0_30, %c14] : memref<1x32xf32, #tpu.memory_space<smem>>
    %160 = vector.broadcast %159 : f32 to vector<8x8xf32>
    %161 = arith.mulf %160, %158 : vector<8x8xf32>
    %162 = arith.addf %152, %161 : vector<8x8xf32>
    %163 = vector.extract_strided_slice %10 {offsets = [0, 15], sizes = [8, 1], strides = [1, 1]} : vector<8x32xf32> to vector<8x1xf32>
    %164 = vector.extract_strided_slice %5 {offsets = [15, 0], sizes = [1, 8], strides = [1, 1]} : vector<32x8xf32> to vector<1x8xf32>
    %165 = vector.broadcast %163 : vector<8x1xf32> to vector<8x8xf32>
    %166 = vector.broadcast %164 : vector<1x8xf32> to vector<8x8xf32>
    %167 = arith.addf %165, %166 : vector<8x8xf32>
    %168 = math.tanh %167 : vector<8x8xf32>
    %c0_31 = arith.constant 0 : index
    %c15 = arith.constant 15 : index
    %169 = memref.load %arg7[%c0_31, %c15] : memref<1x32xf32, #tpu.memory_space<smem>>
    %170 = vector.broadcast %169 : f32 to vector<8x8xf32>
    %171 = arith.mulf %170, %168 : vector<8x8xf32>
    %172 = arith.addf %162, %171 : vector<8x8xf32>
    %173 = vector.extract_strided_slice %10 {offsets = [0, 16], sizes = [8, 1], strides = [1, 1]} : vector<8x32xf32> to vector<8x1xf32>
    %174 = vector.extract_strided_slice %5 {offsets = [16, 0], sizes = [1, 8], strides = [1, 1]} : vector<32x8xf32> to vector<1x8xf32>
    %175 = vector.broadcast %173 : vector<8x1xf32> to vector<8x8xf32>
    %176 = vector.broadcast %174 : vector<1x8xf32> to vector<8x8xf32>
    %177 = arith.addf %175, %176 : vector<8x8xf32>
    %178 = math.tanh %177 : vector<8x8xf32>
    %c0_32 = arith.constant 0 : index
    %c16 = arith.constant 16 : index
    %179 = memref.load %arg7[%c0_32, %c16] : memref<1x32xf32, #tpu.memory_space<smem>>
    %180 = vector.broadcast %179 : f32 to vector<8x8xf32>
    %181 = arith.mulf %180, %178 : vector<8x8xf32>
    %182 = arith.addf %172, %181 : vector<8x8xf32>
    %183 = vector.extract_strided_slice %10 {offsets = [0, 17], sizes = [8, 1], strides = [1, 1]} : vector<8x32xf32> to vector<8x1xf32>
    %184 = vector.extract_strided_slice %5 {offsets = [17, 0], sizes = [1, 8], strides = [1, 1]} : vector<32x8xf32> to vector<1x8xf32>
    %185 = vector.broadcast %183 : vector<8x1xf32> to vector<8x8xf32>
    %186 = vector.broadcast %184 : vector<1x8xf32> to vector<8x8xf32>
    %187 = arith.addf %185, %186 : vector<8x8xf32>
    %188 = math.tanh %187 : vector<8x8xf32>
    %c0_33 = arith.constant 0 : index
    %c17 = arith.constant 17 : index
    %189 = memref.load %arg7[%c0_33, %c17] : memref<1x32xf32, #tpu.memory_space<smem>>
    %190 = vector.broadcast %189 : f32 to vector<8x8xf32>
    %191 = arith.mulf %190, %188 : vector<8x8xf32>
    %192 = arith.addf %182, %191 : vector<8x8xf32>
    %193 = vector.extract_strided_slice %10 {offsets = [0, 18], sizes = [8, 1], strides = [1, 1]} : vector<8x32xf32> to vector<8x1xf32>
    %194 = vector.extract_strided_slice %5 {offsets = [18, 0], sizes = [1, 8], strides = [1, 1]} : vector<32x8xf32> to vector<1x8xf32>
    %195 = vector.broadcast %193 : vector<8x1xf32> to vector<8x8xf32>
    %196 = vector.broadcast %194 : vector<1x8xf32> to vector<8x8xf32>
    %197 = arith.addf %195, %196 : vector<8x8xf32>
    %198 = math.tanh %197 : vector<8x8xf32>
    %c0_34 = arith.constant 0 : index
    %c18 = arith.constant 18 : index
    %199 = memref.load %arg7[%c0_34, %c18] : memref<1x32xf32, #tpu.memory_space<smem>>
    %200 = vector.broadcast %199 : f32 to vector<8x8xf32>
    %201 = arith.mulf %200, %198 : vector<8x8xf32>
    %202 = arith.addf %192, %201 : vector<8x8xf32>
    %203 = vector.extract_strided_slice %10 {offsets = [0, 19], sizes = [8, 1], strides = [1, 1]} : vector<8x32xf32> to vector<8x1xf32>
    %204 = vector.extract_strided_slice %5 {offsets = [19, 0], sizes = [1, 8], strides = [1, 1]} : vector<32x8xf32> to vector<1x8xf32>
    %205 = vector.broadcast %203 : vector<8x1xf32> to vector<8x8xf32>
    %206 = vector.broadcast %204 : vector<1x8xf32> to vector<8x8xf32>
    %207 = arith.addf %205, %206 : vector<8x8xf32>
    %208 = math.tanh %207 : vector<8x8xf32>
    %c0_35 = arith.constant 0 : index
    %c19 = arith.constant 19 : index
    %209 = memref.load %arg7[%c0_35, %c19] : memref<1x32xf32, #tpu.memory_space<smem>>
    %210 = vector.broadcast %209 : f32 to vector<8x8xf32>
    %211 = arith.mulf %210, %208 : vector<8x8xf32>
    %212 = arith.addf %202, %211 : vector<8x8xf32>
    %213 = vector.extract_strided_slice %10 {offsets = [0, 20], sizes = [8, 1], strides = [1, 1]} : vector<8x32xf32> to vector<8x1xf32>
    %214 = vector.extract_strided_slice %5 {offsets = [20, 0], sizes = [1, 8], strides = [1, 1]} : vector<32x8xf32> to vector<1x8xf32>
    %215 = vector.broadcast %213 : vector<8x1xf32> to vector<8x8xf32>
    %216 = vector.broadcast %214 : vector<1x8xf32> to vector<8x8xf32>
    %217 = arith.addf %215, %216 : vector<8x8xf32>
    %218 = math.tanh %217 : vector<8x8xf32>
    %c0_36 = arith.constant 0 : index
    %c20 = arith.constant 20 : index
    %219 = memref.load %arg7[%c0_36, %c20] : memref<1x32xf32, #tpu.memory_space<smem>>
    %220 = vector.broadcast %219 : f32 to vector<8x8xf32>
    %221 = arith.mulf %220, %218 : vector<8x8xf32>
    %222 = arith.addf %212, %221 : vector<8x8xf32>
    %223 = vector.extract_strided_slice %10 {offsets = [0, 21], sizes = [8, 1], strides = [1, 1]} : vector<8x32xf32> to vector<8x1xf32>
    %224 = vector.extract_strided_slice %5 {offsets = [21, 0], sizes = [1, 8], strides = [1, 1]} : vector<32x8xf32> to vector<1x8xf32>
    %225 = vector.broadcast %223 : vector<8x1xf32> to vector<8x8xf32>
    %226 = vector.broadcast %224 : vector<1x8xf32> to vector<8x8xf32>
    %227 = arith.addf %225, %226 : vector<8x8xf32>
    %228 = math.tanh %227 : vector<8x8xf32>
    %c0_37 = arith.constant 0 : index
    %c21 = arith.constant 21 : index
    %229 = memref.load %arg7[%c0_37, %c21] : memref<1x32xf32, #tpu.memory_space<smem>>
    %230 = vector.broadcast %229 : f32 to vector<8x8xf32>
    %231 = arith.mulf %230, %228 : vector<8x8xf32>
    %232 = arith.addf %222, %231 : vector<8x8xf32>
    %233 = vector.extract_strided_slice %10 {offsets = [0, 22], sizes = [8, 1], strides = [1, 1]} : vector<8x32xf32> to vector<8x1xf32>
    %234 = vector.extract_strided_slice %5 {offsets = [22, 0], sizes = [1, 8], strides = [1, 1]} : vector<32x8xf32> to vector<1x8xf32>
    %235 = vector.broadcast %233 : vector<8x1xf32> to vector<8x8xf32>
    %236 = vector.broadcast %234 : vector<1x8xf32> to vector<8x8xf32>
    %237 = arith.addf %235, %236 : vector<8x8xf32>
    %238 = math.tanh %237 : vector<8x8xf32>
    %c0_38 = arith.constant 0 : index
    %c22 = arith.constant 22 : index
    %239 = memref.load %arg7[%c0_38, %c22] : memref<1x32xf32, #tpu.memory_space<smem>>
    %240 = vector.broadcast %239 : f32 to vector<8x8xf32>
    %241 = arith.mulf %240, %238 : vector<8x8xf32>
    %242 = arith.addf %232, %241 : vector<8x8xf32>
    %243 = vector.extract_strided_slice %10 {offsets = [0, 23], sizes = [8, 1], strides = [1, 1]} : vector<8x32xf32> to vector<8x1xf32>
    %244 = vector.extract_strided_slice %5 {offsets = [23, 0], sizes = [1, 8], strides = [1, 1]} : vector<32x8xf32> to vector<1x8xf32>
    %245 = vector.broadcast %243 : vector<8x1xf32> to vector<8x8xf32>
    %246 = vector.broadcast %244 : vector<1x8xf32> to vector<8x8xf32>
    %247 = arith.addf %245, %246 : vector<8x8xf32>
    %248 = math.tanh %247 : vector<8x8xf32>
    %c0_39 = arith.constant 0 : index
    %c23 = arith.constant 23 : index
    %249 = memref.load %arg7[%c0_39, %c23] : memref<1x32xf32, #tpu.memory_space<smem>>
    %250 = vector.broadcast %249 : f32 to vector<8x8xf32>
    %251 = arith.mulf %250, %248 : vector<8x8xf32>
    %252 = arith.addf %242, %251 : vector<8x8xf32>
    %253 = vector.extract_strided_slice %10 {offsets = [0, 24], sizes = [8, 1], strides = [1, 1]} : vector<8x32xf32> to vector<8x1xf32>
    %254 = vector.extract_strided_slice %5 {offsets = [24, 0], sizes = [1, 8], strides = [1, 1]} : vector<32x8xf32> to vector<1x8xf32>
    %255 = vector.broadcast %253 : vector<8x1xf32> to vector<8x8xf32>
    %256 = vector.broadcast %254 : vector<1x8xf32> to vector<8x8xf32>
    %257 = arith.addf %255, %256 : vector<8x8xf32>
    %258 = math.tanh %257 : vector<8x8xf32>
    %c0_40 = arith.constant 0 : index
    %c24 = arith.constant 24 : index
    %259 = memref.load %arg7[%c0_40, %c24] : memref<1x32xf32, #tpu.memory_space<smem>>
    %260 = vector.broadcast %259 : f32 to vector<8x8xf32>
    %261 = arith.mulf %260, %258 : vector<8x8xf32>
    %262 = arith.addf %252, %261 : vector<8x8xf32>
    %263 = vector.extract_strided_slice %10 {offsets = [0, 25], sizes = [8, 1], strides = [1, 1]} : vector<8x32xf32> to vector<8x1xf32>
    %264 = vector.extract_strided_slice %5 {offsets = [25, 0], sizes = [1, 8], strides = [1, 1]} : vector<32x8xf32> to vector<1x8xf32>
    %265 = vector.broadcast %263 : vector<8x1xf32> to vector<8x8xf32>
    %266 = vector.broadcast %264 : vector<1x8xf32> to vector<8x8xf32>
    %267 = arith.addf %265, %266 : vector<8x8xf32>
    %268 = math.tanh %267 : vector<8x8xf32>
    %c0_41 = arith.constant 0 : index
    %c25 = arith.constant 25 : index
    %269 = memref.load %arg7[%c0_41, %c25] : memref<1x32xf32, #tpu.memory_space<smem>>
    %270 = vector.broadcast %269 : f32 to vector<8x8xf32>
    %271 = arith.mulf %270, %268 : vector<8x8xf32>
    %272 = arith.addf %262, %271 : vector<8x8xf32>
    %273 = vector.extract_strided_slice %10 {offsets = [0, 26], sizes = [8, 1], strides = [1, 1]} : vector<8x32xf32> to vector<8x1xf32>
    %274 = vector.extract_strided_slice %5 {offsets = [26, 0], sizes = [1, 8], strides = [1, 1]} : vector<32x8xf32> to vector<1x8xf32>
    %275 = vector.broadcast %273 : vector<8x1xf32> to vector<8x8xf32>
    %276 = vector.broadcast %274 : vector<1x8xf32> to vector<8x8xf32>
    %277 = arith.addf %275, %276 : vector<8x8xf32>
    %278 = math.tanh %277 : vector<8x8xf32>
    %c0_42 = arith.constant 0 : index
    %c26 = arith.constant 26 : index
    %279 = memref.load %arg7[%c0_42, %c26] : memref<1x32xf32, #tpu.memory_space<smem>>
    %280 = vector.broadcast %279 : f32 to vector<8x8xf32>
    %281 = arith.mulf %280, %278 : vector<8x8xf32>
    %282 = arith.addf %272, %281 : vector<8x8xf32>
    %283 = vector.extract_strided_slice %10 {offsets = [0, 27], sizes = [8, 1], strides = [1, 1]} : vector<8x32xf32> to vector<8x1xf32>
    %284 = vector.extract_strided_slice %5 {offsets = [27, 0], sizes = [1, 8], strides = [1, 1]} : vector<32x8xf32> to vector<1x8xf32>
    %285 = vector.broadcast %283 : vector<8x1xf32> to vector<8x8xf32>
    %286 = vector.broadcast %284 : vector<1x8xf32> to vector<8x8xf32>
    %287 = arith.addf %285, %286 : vector<8x8xf32>
    %288 = math.tanh %287 : vector<8x8xf32>
    %c0_43 = arith.constant 0 : index
    %c27 = arith.constant 27 : index
    %289 = memref.load %arg7[%c0_43, %c27] : memref<1x32xf32, #tpu.memory_space<smem>>
    %290 = vector.broadcast %289 : f32 to vector<8x8xf32>
    %291 = arith.mulf %290, %288 : vector<8x8xf32>
    %292 = arith.addf %282, %291 : vector<8x8xf32>
    %293 = vector.extract_strided_slice %10 {offsets = [0, 28], sizes = [8, 1], strides = [1, 1]} : vector<8x32xf32> to vector<8x1xf32>
    %294 = vector.extract_strided_slice %5 {offsets = [28, 0], sizes = [1, 8], strides = [1, 1]} : vector<32x8xf32> to vector<1x8xf32>
    %295 = vector.broadcast %293 : vector<8x1xf32> to vector<8x8xf32>
    %296 = vector.broadcast %294 : vector<1x8xf32> to vector<8x8xf32>
    %297 = arith.addf %295, %296 : vector<8x8xf32>
    %298 = math.tanh %297 : vector<8x8xf32>
    %c0_44 = arith.constant 0 : index
    %c28 = arith.constant 28 : index
    %299 = memref.load %arg7[%c0_44, %c28] : memref<1x32xf32, #tpu.memory_space<smem>>
    %300 = vector.broadcast %299 : f32 to vector<8x8xf32>
    %301 = arith.mulf %300, %298 : vector<8x8xf32>
    %302 = arith.addf %292, %301 : vector<8x8xf32>
    %303 = vector.extract_strided_slice %10 {offsets = [0, 29], sizes = [8, 1], strides = [1, 1]} : vector<8x32xf32> to vector<8x1xf32>
    %304 = vector.extract_strided_slice %5 {offsets = [29, 0], sizes = [1, 8], strides = [1, 1]} : vector<32x8xf32> to vector<1x8xf32>
    %305 = vector.broadcast %303 : vector<8x1xf32> to vector<8x8xf32>
    %306 = vector.broadcast %304 : vector<1x8xf32> to vector<8x8xf32>
    %307 = arith.addf %305, %306 : vector<8x8xf32>
    %308 = math.tanh %307 : vector<8x8xf32>
    %c0_45 = arith.constant 0 : index
    %c29 = arith.constant 29 : index
    %309 = memref.load %arg7[%c0_45, %c29] : memref<1x32xf32, #tpu.memory_space<smem>>
    %310 = vector.broadcast %309 : f32 to vector<8x8xf32>
    %311 = arith.mulf %310, %308 : vector<8x8xf32>
    %312 = arith.addf %302, %311 : vector<8x8xf32>
    %313 = vector.extract_strided_slice %10 {offsets = [0, 30], sizes = [8, 1], strides = [1, 1]} : vector<8x32xf32> to vector<8x1xf32>
    %314 = vector.extract_strided_slice %5 {offsets = [30, 0], sizes = [1, 8], strides = [1, 1]} : vector<32x8xf32> to vector<1x8xf32>
    %315 = vector.broadcast %313 : vector<8x1xf32> to vector<8x8xf32>
    %316 = vector.broadcast %314 : vector<1x8xf32> to vector<8x8xf32>
    %317 = arith.addf %315, %316 : vector<8x8xf32>
    %318 = math.tanh %317 : vector<8x8xf32>
    %c0_46 = arith.constant 0 : index
    %c30 = arith.constant 30 : index
    %319 = memref.load %arg7[%c0_46, %c30] : memref<1x32xf32, #tpu.memory_space<smem>>
    %320 = vector.broadcast %319 : f32 to vector<8x8xf32>
    %321 = arith.mulf %320, %318 : vector<8x8xf32>
    %322 = arith.addf %312, %321 : vector<8x8xf32>
    %323 = vector.extract_strided_slice %10 {offsets = [0, 31], sizes = [8, 1], strides = [1, 1]} : vector<8x32xf32> to vector<8x1xf32>
    %324 = vector.extract_strided_slice %5 {offsets = [31, 0], sizes = [1, 8], strides = [1, 1]} : vector<32x8xf32> to vector<1x8xf32>
    %325 = vector.broadcast %323 : vector<8x1xf32> to vector<8x8xf32>
    %326 = vector.broadcast %324 : vector<1x8xf32> to vector<8x8xf32>
    %327 = arith.addf %325, %326 : vector<8x8xf32>
    %328 = math.tanh %327 : vector<8x8xf32>
    %c0_47 = arith.constant 0 : index
    %c31 = arith.constant 31 : index
    %329 = memref.load %arg7[%c0_47, %c31] : memref<1x32xf32, #tpu.memory_space<smem>>
    %330 = vector.broadcast %329 : f32 to vector<8x8xf32>
    %331 = arith.mulf %330, %328 : vector<8x8xf32>
    %332 = arith.addf %322, %331 : vector<8x8xf32>
    %333 = vector.broadcast %11 : f32 to vector<8x8xf32>
    %334 = arith.addf %332, %333 : vector<8x8xf32>
    %c0_48 = arith.constant 0 : index
    %c0_49 = arith.constant 0 : index
    %335 = vector.load %arg10[%c0_48, %c0_49] : memref<8x8xf32, #tpu.memory_space<vmem>>, vector<8x8xf32>
    tpu.vector_store %arg10[%c0_48, %c0_49], %334 {strides = array<i32>} : memref<8x8xf32, #tpu.memory_space<vmem>>, vector<8x8xf32>,
    %c0_50 = arith.constant 0 : index
    %c0_51 = arith.constant 0 : index
    %336 = vector.load %arg10[%c0_50, %c0_51] : memref<8x8xf32, #tpu.memory_space<vmem>>, vector<8x8xf32>
    %cst_52 = arith.constant dense<0xFF800000> : vector<8xf32>
    %337 = vector.multi_reduction <maximumf>, %336, %cst_52 [1] : vector<8x8xf32> to vector<8xf32>
    %338 = vector.shape_cast %337 : vector<8xf32> to vector<8x1xf32>
    %339 = vector.broadcast %338 : vector<8x1xf32> to vector<8x8xf32>
    %340 = arith.subf %336, %339 : vector<8x8xf32>
    %341 = math.exp %340 : vector<8x8xf32>
    %cst_53 = arith.constant dense<0.000000e+00> : vector<8xf32>
    %342 = vector.multi_reduction <add>, %341, %cst_53 [1] : vector<8x8xf32> to vector<8xf32>
    %343 = vector.shape_cast %342 : vector<8xf32> to vector<8x1xf32>
    %cst_54 = arith.constant dense<0.000000e+00> : vector<8x128xf32>
    %344 = tpu.matmul %341, %3, %cst_54 {dimension_numbers = #tpu.dot_dimension_numbers<[1], [0], [0], [1], [0, 0, 1, 1], [], []>} : vector<8x8xf32>, vector<8x128xf32>, vector<8x128xf32> -> vector<8x128xf32>
    %cst_55 = arith.constant 1.000000e+00 : f32
    %345 = vector.broadcast %cst_55 : f32 to vector<8x1xf32>
    %346 = arith.divf %345, %343 : vector<8x1xf32>
    %347 = vector.broadcast %346 : vector<8x1xf32> to vector<8x128xf32>
    %348 = arith.mulf %344, %347 : vector<8x128xf32>
    %c0_56 = arith.constant 0 : index
    %c0_57 = arith.constant 0 : index
    %c0_58 = arith.constant 0 : index
    %349 = vector.load %arg9[%c0_56, %c0_57, %c0_58] : memref<1x8x128xf32, #tpu.memory_space<vmem>>, vector<1x8x128xf32>
    %350 = vector.shape_cast %349 : vector<1x8x128xf32> to vector<8x128xf32>
    %351 = vector.shape_cast %348 : vector<8x128xf32> to vector<1x8x128xf32>
    tpu.vector_store %arg9[%c0_56, %c0_57, %c0_58], %351 {strides = array<i32>} : memref<1x8x128xf32, #tpu.memory_space<vmem>>, vector<1x8x128xf32>,
    return
  }
  func.func @transform_0(%arg0: i32, %arg1: i32) -> (i32, i32, i32) {
    %c0_i32 = arith.constant 0 : i32
    %c0_i32_0 = arith.constant 0 : i32
    return %arg0, %arg1, %c0_i32 : i32, i32, i32
  }
  func.func @transform_1(%arg0: i32, %arg1: i32) -> (i32, i32, i32) {
    %c0_i32 = arith.constant 0 : i32
    %c0_i32_0 = arith.constant 0 : i32
    %c0_i32_1 = arith.constant 0 : i32
    return %arg0, %c0_i32, %c0_i32_0 : i32, i32, i32
  }
  func.func @transform_2(%arg0: i32, %arg1: i32) -> (i32, i32, i32) {
    %c0_i32 = arith.constant 0 : i32
    %c0_i32_0 = arith.constant 0 : i32
    %c0_i32_1 = arith.constant 0 : i32
    return %arg0, %c0_i32, %c0_i32_0 : i32, i32, i32
  }
  func.func @transform_3(%arg0: i32, %arg1: i32) -> (i32, i32) {
    %c0_i32 = arith.constant 0 : i32
    %c0_i32_0 = arith.constant 0 : i32
    %c0_i32_1 = arith.constant 0 : i32
    return %c0_i32, %c0_i32_0 : i32, i32
  }
  func.func @transform_4(%arg0: i32, %arg1: i32) -> (i32, i32) {
    %c0_i32 = arith.constant 0 : i32
    %c0_i32_0 = arith.constant 0 : i32
    %c0_i32_1 = arith.constant 0 : i32
    return %c0_i32, %c0_i32_0 : i32, i32
  }
  func.func @transform_5(%arg0: i32, %arg1: i32) -> (i32, i32) {
    %c0_i32 = arith.constant 0 : i32
    %c0_i32_0 = arith.constant 0 : i32
    %c0_i32_1 = arith.constant 0 : i32
    return %c0_i32, %c0_i32_0 : i32, i32
  }
  func.func @transform_6(%arg0: i32, %arg1: i32) -> (i32, i32) {
    %c0_i32 = arith.constant 0 : i32
    %c0_i32_0 = arith.constant 0 : i32
    %c0_i32_1 = arith.constant 0 : i32
    return %c0_i32, %c0_i32_0 : i32, i32
  }
  func.func @transform_7(%arg0: i32, %arg1: i32) -> (i32, i32, i32) {
    %c0_i32 = arith.constant 0 : i32
    %c0_i32_0 = arith.constant 0 : i32
    return %arg0, %arg1, %c0_i32 : i32, i32, i32
  }
}

</mosaic_0001>

<llo_original>
// kernel: tpu_custom_call.1
$region0: #{tpu_custom_call.1}
  #allocation0 [shape = 'u32[]', space=smem, size = 0x4, offset = 0x4, fixed_abs, tag = 'smem constant byte address 0x4 - core index']
  #allocation1 [shape = 'u32[144,128]{1,0:T(1,128)}', space=vmem, size = 0x12000, scoped, tag = 'internal scratch']
  #allocation2 [shape = 'f32[8,8]{1,0:T(8,128)}', space=vmem, size = 0x1000, scoped, tag = 'scratch operand']
  #allocation3 [shape = 'f32[1,1]{1,0:T(1,128)S(6)}', space=smem, size = 0x200, scoped, tag = 'scoped memory for tpu_custom_call.1']
  %s0 = inlined_call_operand.vmem [shape: f32[2,8,16], index: 0, kind: input, shape index: {}]
  %s1 = inlined_call_operand.vmem [shape: f32[2,8,128], index: 1, kind: input, shape index: {}]
  %s2 = inlined_call_operand.vmem [shape: f32[2,32,8], index: 2, kind: input, shape index: {}]
  %s3 = inlined_call_operand.vmem [shape: f32[16,32], index: 3, kind: input, shape index: {}]
  %s4 = inlined_call_operand.vmem [shape: f32[1,32], index: 4, kind: input, shape index: {}]
  %s5 = inlined_call_operand.vmem [shape: f32[1,32], index: 5, kind: input, shape index: {}]
  %s6 = inlined_call_operand.<no memory space> [shape: f32[1,1], index: 6, kind: input, shape index: {}]
  %s7 = inlined_call_operand.hbm [shape: f32[2,8,128], index: 7, kind: output, shape index: {}]
  %s8 = sld [smem:[#allocation0]]
  $region65: #{tpu_custom_call.1} parent=0
    _
  %s10 = ssub.s32 1, %s8
  %s11 = scalar_select 0, %s10, %s8
  %12 = sst [smem:[#allocation3]] %s6
  $region1: #{tpu_custom_call.1} parent=0
    #allocation4 [shape = 'u8[512]{0}', space=smem, size = 0x200, scoped, tag = 'input window, operand 5, single buffered']
    #allocation5 [shape = 's32[2]{0}', space=sflag, size = 0x8, scoped, tag = 'scoped memory for tpu_custom_call.1']
    #allocation6 [shape = 's32[2]{0}', space=sflag, size = 0x8, scoped, tag = 'scoped memory for tpu_custom_call.1']
    #allocation7 [shape = 'u8[8192]{0}', space=vmem, size = 0x2000, scoped, tag = 'output window, operand 0']
    %13 = vsyncpa [#allocation6], 0
    %14 = vsyncpa [#allocation5], 0
    %s15 = scalar_lea.sflag [#allocation5], 1
    %16 = vsyncpa %s15, 0
    loop: start=0, step=1, limit=4
    $region2: #{tpu_custom_call.1} parent=1 // loop_pre_header
      _
    $region3: #{tpu_custom_call.1} parent=1 // loop_header
      %s18 = sphi 0, %s22
      %p19 = scmp.ge.s32.totalorder %s18, 4
      %s25 = sphi 0, %s37
      %s26 = sphi 0, %s33
      %s27 = sphi 0, %s25
      %s28 = sphi 0, %s26
      %s29 = sphi 0, %s27
      %s30 = sphi 0, %s28
      %s42 = sphi 0, %s44
      %s45 = sphi 0, %s42
      %s46 = sphi 0, %s45
      %s62 = sphi 0, %s46
      %s68 = sphi 0, %s70
      %s71 = sphi 0, %s68
      %s72 = sphi 0, %s71
      %s88 = sphi 0, %s72
      %s94 = sphi 0, %s96
      %s97 = sphi 0, %s94
      %s98 = sphi 0, %s97
      %s114 = sphi 0, %s98
      %s118 = sphi 0, %s118
      %s120 = sphi 0, %s118
      %s121 = sphi 0, %s120
      %s135 = sphi 0, %s121
      %s139 = sphi 0, %s139
      %s141 = sphi 0, %s139
      %s142 = sphi 0, %s141
      %s156 = sphi 0, %s142
      %s160 = sphi 0, %s160
      %s162 = sphi 0, %s160
      %s163 = sphi 0, %s162
      %s177 = sphi 0, %s163
      %s181 = sphi 0, %s181
      %s183 = sphi 0, %s181
      %s184 = sphi 0, %s183
      %s198 = sphi 0, %s184
      %s206 = sphi 0, %s208
      %s209 = sphi 0, %s206
      %s210 = sphi 0, %s209
      %s226 = sphi 0, %s210
    $region4: #{tpu_custom_call.1} parent=1 // loop_header_branch
      %21 = sbr.rel (%p19) target = $region8
    $region5: #{tpu_custom_call.1} parent=1 // loop_body
      %s23 = ssub.s32 %s18, 1
      %s24 = ssub.s32 %s18, 2
      %s31 = sadd.s32 1, %s26
      %p32 = scmp.ge.s32.totalorder %s31, 1
      %s33 = scalar_select %p32, 0, %s31
      %s34 = sadd.s32 1, %s25
      %s35 = scalar_select %p32, %s34, %s25
      %p36 = scmp.ge.s32.totalorder %s35, 2
      %s37 = scalar_select %p36, 0, %s35
      %s38 = ssub.s32 %s25, %s37
      %s39 = ssub.s32 %s26, %s33
      %s40 = sor.u32 %s38, %s39
      %p41 = scmp.eq.s32.totalorder %s40, 0
      %s43 = sadd.s32 %s42, 1
      %s44 = scalar_select %p41, %s42, %s43
      %p47 = pneg %p41
      %p48 = scmp.eq.s32.totalorder %s18, 1
      %p49 = por %p47, %p48
      %p50 = scmp.ne.s32.totalorder %s42, %s45
      %p51 = scmp.eq.s32.totalorder %s18, 0
      %p52 = por %p50, %p51
      %p53 = scmp.ne.s32.totalorder %s42, %s45
      %p54 = scmp.eq.s32.totalorder %s23, 1
      %p55 = por %p53, %p54
      %p56 = scmp.ne.s32.totalorder %s45, %s46
      %p57 = scmp.eq.s32.totalorder %s23, 0
      %p58 = por %p56, %p57
      %p59 = scmp.ne.s32.totalorder %s45, %s46
      %p60 = scmp.eq.s32.totalorder %s24, 1
      %p61 = por %p59, %p60
      %p63 = scmp.ne.s32.totalorder %s46, %s62
      %p64 = scmp.eq.s32.totalorder %s24, 0
      %p65 = por %p63, %p64
      %s66 = ssub.s32 %s25, %s37
      %p67 = scmp.eq.s32.totalorder %s66, 0
      %s69 = sadd.s32 %s68, 1
      %s70 = scalar_select %p67, %s68, %s69
      %p73 = pneg %p67
      %p74 = scmp.eq.s32.totalorder %s18, 1
      %p75 = por %p73, %p74
      %p76 = scmp.ne.s32.totalorder %s68, %s71
      %p77 = scmp.eq.s32.totalorder %s18, 0
      %p78 = por %p76, %p77
      %p79 = scmp.ne.s32.totalorder %s68, %s71
      %p80 = scmp.eq.s32.totalorder %s23, 1
      %p81 = por %p79, %p80
      %p82 = scmp.ne.s32.totalorder %s71, %s72
      %p83 = scmp.eq.s32.totalorder %s23, 0
      %p84 = por %p82, %p83
      %p85 = scmp.ne.s32.totalorder %s71, %s72
      %p86 = scmp.eq.s32.totalorder %s24, 1
      %p87 = por %p85, %p86
      %p89 = scmp.ne.s32.totalorder %s72, %s88
      %p90 = scmp.eq.s32.totalorder %s24, 0
      %p91 = por %p89, %p90
      %s92 = ssub.s32 %s25, %s37
      %p93 = scmp.eq.s32.totalorder %s92, 0
      %s95 = sadd.s32 %s94, 1
      %s96 = scalar_select %p93, %s94, %s95
      %p99 = pneg %p93
      %p100 = scmp.eq.s32.totalorder %s18, 1
      %p101 = por %p99, %p100
      %p102 = scmp.ne.s32.totalorder %s94, %s97
      %p103 = scmp.eq.s32.totalorder %s18, 0
      %p104 = por %p102, %p103
      %p105 = scmp.ne.s32.totalorder %s94, %s97
      %p106 = scmp.eq.s32.totalorder %s23, 1
      %p107 = por %p105, %p106
      %p108 = scmp.ne.s32.totalorder %s97, %s98
      %p109 = scmp.eq.s32.totalorder %s23, 0
      %p110 = por %p108, %p109
      %p111 = scmp.ne.s32.totalorder %s97, %s98
      %p112 = scmp.eq.s32.totalorder %s24, 1
      %p113 = por %p111, %p112
      %p115 = scmp.ne.s32.totalorder %s98, %s114
      %p116 = scmp.eq.s32.totalorder %s24, 0
      %p117 = por %p115, %p116
      %s119 = sadd.s32 %s118, 1
      %p122 = scmp.eq.s32.totalorder %s18, 1
      %p123 = scmp.ne.s32.totalorder %s118, %s120
      %p124 = scmp.eq.s32.totalorder %s18, 0
      %p125 = por %p123, %p124
      %p126 = scmp.ne.s32.totalorder %s118, %s120
      %p127 = scmp.eq.s32.totalorder %s23, 1
      %p128 = por %p126, %p127
      %p129 = scmp.ne.s32.totalorder %s120, %s121
      %p130 = scmp.eq.s32.totalorder %s23, 0
      %p131 = por %p129, %p130
      %p132 = scmp.ne.s32.totalorder %s120, %s121
      %p133 = scmp.eq.s32.totalorder %s24, 1
      %p134 = por %p132, %p133
      %p136 = scmp.ne.s32.totalorder %s121, %s135
      %p137 = scmp.eq.s32.totalorder %s24, 0
      %p138 = por %p136, %p137
      %s140 = sadd.s32 %s139, 1
      %p143 = scmp.eq.s32.totalorder %s18, 1
      %p144 = scmp.ne.s32.totalorder %s139, %s141
      %p145 = scmp.eq.s32.totalorder %s18, 0
      %p146 = por %p144, %p145
      %p147 = scmp.ne.s32.totalorder %s139, %s141
      %p148 = scmp.eq.s32.totalorder %s23, 1
      %p149 = por %p147, %p148
      %p150 = scmp.ne.s32.totalorder %s141, %s142
      %p151 = scmp.eq.s32.totalorder %s23, 0
      %p152 = por %p150, %p151
      %p153 = scmp.ne.s32.totalorder %s141, %s142
      %p154 = scmp.eq.s32.totalorder %s24, 1
      %p155 = por %p153, %p154
      %p157 = scmp.ne.s32.totalorder %s142, %s156
      %p158 = scmp.eq.s32.totalorder %s24, 0
      %p159 = por %p157, %p158
      %s161 = sadd.s32 %s160, 1
      %p164 = scmp.eq.s32.totalorder %s18, 1
      %p165 = scmp.ne.s32.totalorder %s160, %s162
      %p166 = scmp.eq.s32.totalorder %s18, 0
      %p167 = por %p165, %p166
      %p168 = scmp.ne.s32.totalorder %s160, %s162
      %p169 = scmp.eq.s32.totalorder %s23, 1
      %p170 = por %p168, %p169
      %p171 = scmp.ne.s32.totalorder %s162, %s163
      %p172 = scmp.eq.s32.totalorder %s23, 0
      %p173 = por %p171, %p172
      %p174 = scmp.ne.s32.totalorder %s162, %s163
      %p175 = scmp.eq.s32.totalorder %s24, 1
      %p176 = por %p174, %p175
      %p178 = scmp.ne.s32.totalorder %s163, %s177
      %p179 = scmp.eq.s32.totalorder %s24, 0
      %p180 = por %p178, %p179
      %s182 = sadd.s32 %s181, 1
      %p185 = scmp.eq.s32.totalorder %s18, 1
      %p186 = scmp.ne.s32.totalorder %s181, %s183
      %p187 = scmp.eq.s32.totalorder %s18, 0
      %p188 = por %p186, %p187
      %p189 = scmp.ne.s32.totalorder %s181, %s183
      %p190 = scmp.eq.s32.totalorder %s23, 1
      %p191 = por %p189, %p190
      %p192 = scmp.ne.s32.totalorder %s183, %s184
      %p193 = scmp.eq.s32.totalorder %s23, 0
      %p194 = por %p192, %p193
      %p195 = scmp.ne.s32.totalorder %s183, %s184
      %p196 = scmp.eq.s32.totalorder %s24, 1
      %p197 = por %p195, %p196
      %p199 = scmp.ne.s32.totalorder %s184, %s198
      %p200 = scmp.eq.s32.totalorder %s24, 0
      %p201 = por %p199, %p200
      %s202 = ssub.s32 %s25, %s37
      %s203 = ssub.s32 %s26, %s33
      %s204 = sor.u32 %s202, %s203
      %p205 = scmp.eq.s32.totalorder %s204, 0
      %s207 = sadd.s32 %s206, 1
      %s208 = scalar_select %p205, %s206, %s207
      %p211 = pneg %p205
      %p212 = scmp.eq.s32.totalorder %s18, 1
      %p213 = por %p211, %p212
      %p214 = scmp.ne.s32.totalorder %s206, %s209
      %p215 = scmp.eq.s32.totalorder %s18, 0
      %p216 = por %p214, %p215
      %p217 = scmp.ne.s32.totalorder %s206, %s209
      %p218 = scmp.eq.s32.totalorder %s23, 1
      %p219 = por %p217, %p218
      %p220 = scmp.ne.s32.totalorder %s209, %s210
      %p221 = scmp.eq.s32.totalorder %s23, 0
      %p222 = por %p220, %p221
      %p223 = scmp.ne.s32.totalorder %s209, %s210
      %p224 = scmp.eq.s32.totalorder %s24, 1
      %p225 = por %p223, %p224
      %p227 = scmp.ne.s32.totalorder %s210, %s226
      %p228 = scmp.eq.s32.totalorder %s24, 0
      %p229 = por %p227, %p228
      %p230 = scmp.le.s32.totalorder 1, %s18
      %p231 = scmp.lt.s32.totalorder %s18, 3
      %p232 = pnand %p230, %p231
      %p233 = pneg %p232
      // Predicated region
      $region9: #{tpu_custom_call.1} parent=5 // pred_check
        _
      $region10: #{tpu_custom_call.1} parent=5 // pred_check_branch
        %235 = sbr.rel (%p232) target = $region12
      $region11: #{tpu_custom_call.1} parent=5 // pred_region
        %s236 = ssub.s32 %s18, 1
        // Predicated region
        $region13: #{tpu_custom_call.1} parent=11 // pred_check
          %p237 = pneg %p131
        $region14: #{tpu_custom_call.1} parent=11 // pred_check_branch
          %239 = sbr.rel (%p237) target = $region16
        $region15: #{tpu_custom_call.1} parent=11 // pred_region
          _
        $region16: #{tpu_custom_call.1} parent=11 // pred_fallthru
          _
        // Predicated region
        $region17: #{tpu_custom_call.1} parent=11 // pred_check
          %p240 = pneg %p152
        $region18: #{tpu_custom_call.1} parent=11 // pred_check_branch
          %242 = sbr.rel (%p240) target = $region20
        $region19: #{tpu_custom_call.1} parent=11 // pred_region
          _
        $region20: #{tpu_custom_call.1} parent=11 // pred_fallthru
          _
        // Predicated region
        $region21: #{tpu_custom_call.1} parent=11 // pred_check
          %p243 = pneg %p173
        $region22: #{tpu_custom_call.1} parent=11 // pred_check_branch
          %245 = sbr.rel (%p243) target = $region24
        $region23: #{tpu_custom_call.1} parent=11 // pred_region
          %s247 = ssub.s32 16, 16
          %248 = vsyncadd [#allocation6], %s247
          %s250 = sshll.u32 %s5, 4
          %s251 = int_to_ptr.vmem [resolvable:$true] %s250
          %253 = dma.vmem_to_smem %s251, 16, [#allocation4], [#allocation6]
        $region24: #{tpu_custom_call.1} parent=11 // pred_fallthru
          _
        // Predicated region
        $region25: #{tpu_custom_call.1} parent=11 // pred_check
          %p254 = pneg %p194
        $region26: #{tpu_custom_call.1} parent=11 // pred_check_branch
          %256 = sbr.rel (%p254) target = $region28
        $region27: #{tpu_custom_call.1} parent=11 // pred_region
          _
        $region28: #{tpu_custom_call.1} parent=11 // pred_fallthru
          _
      $region12: #{tpu_custom_call.1} parent=5 // pred_fallthru
        _
      %p257 = scmp.lt.s32.totalorder %s18, 2
      // Predicated region
      $region29: #{tpu_custom_call.1} parent=5 // pred_check
        %p258 = pneg %p257
      $region30: #{tpu_custom_call.1} parent=5 // pred_check_branch
        %260 = sbr.rel (%p258) target = $region32
      $region31: #{tpu_custom_call.1} parent=5 // pred_region
        // Predicated region
        $region33: #{tpu_custom_call.1} parent=31 // pred_check
          %p261 = pneg %p52
        $region34: #{tpu_custom_call.1} parent=31 // pred_check_branch
          %263 = sbr.rel (%p261) target = $region36
        $region35: #{tpu_custom_call.1} parent=31 // pred_region
          %p264 = scmp.lt.s32.totalorder %s25, 1
          %s265 = scalar_select %p264, %s25, 1
          %p266 = scmp.lt.s32.totalorder %s26, 0
          %s267 = scalar_select %p266, %s26, 0
          %s268 = sadd.s32 %s267, %s265
          %s269 = smul.addr %s268, 8
          %s270 = scalar_lea.vmem %s0, %s269
        $region36: #{tpu_custom_call.1} parent=31 // pred_fallthru
          _
        // Predicated region
        $region37: #{tpu_custom_call.1} parent=31 // pred_check
          %p271 = pneg %p78
        $region38: #{tpu_custom_call.1} parent=31 // pred_check_branch
          %273 = sbr.rel (%p271) target = $region40
        $region39: #{tpu_custom_call.1} parent=31 // pred_region
          %p274 = scmp.lt.s32.totalorder %s25, 1
          %s275 = scalar_select %p274, %s25, 1
          %s276 = smul.addr %s275, 8
          %s277 = scalar_lea.vmem %s1, %s276
        $region40: #{tpu_custom_call.1} parent=31 // pred_fallthru
          _
        // Predicated region
        $region41: #{tpu_custom_call.1} parent=31 // pred_check
          %p278 = pneg %p104
        $region42: #{tpu_custom_call.1} parent=31 // pred_check_branch
          %280 = sbr.rel (%p278) target = $region44
        $region43: #{tpu_custom_call.1} parent=31 // pred_region
          %p281 = scmp.lt.s32.totalorder %s25, 1
          %s282 = scalar_select %p281, %s25, 1
          %s283 = smul.addr %s282, 4
          %s284 = smul.addr %s283, 8
          %s285 = scalar_lea.vmem %s2, %s284
        $region44: #{tpu_custom_call.1} parent=31 // pred_fallthru
          _
      $region32: #{tpu_custom_call.1} parent=5 // pred_fallthru
        _
      %p286 = scmp.le.s32.totalorder 1, %s18
      %p287 = scmp.lt.s32.totalorder %s18, 3
      %p288 = pnand %p286, %p287
      %p289 = pneg %p288
      // Predicated region
      $region45: #{tpu_custom_call.1} parent=5 // pred_check
        _
      $region46: #{tpu_custom_call.1} parent=5 // pred_check_branch
        %291 = sbr.rel (%p288) target = $region48
      $region47: #{tpu_custom_call.1} parent=5 // pred_region
        %s292 = ssub.s32 %s18, 1
        // Predicated region
        $region49: #{tpu_custom_call.1} parent=47 // pred_check
          %p293 = pneg %p173
        $region50: #{tpu_custom_call.1} parent=47 // pred_check_branch
          %295 = sbr.rel (%p293) target = $region52
        $region51: #{tpu_custom_call.1} parent=47 // pred_region
          %296 = dma.done [#allocation6], 16
        $region52: #{tpu_custom_call.1} parent=47 // pred_fallthru
          _
        %297 = sfence
        %p298 = scmp.lt.s32.totalorder %s27, 1
        %s299 = scalar_select %p298, %s27, 1
        %p300 = scmp.lt.s32.totalorder %s28, 0
        %s301 = scalar_select %p300, %s28, 0
        %s302 = sadd.s32 %s301, %s299
        %s303 = smul.addr %s302, 8
        %s304 = scalar_lea.vmem %s0, %s303
        %p305 = pneg %p58
        %p306 = pneg %p55
        %p307 = scmp.lt.s32.totalorder %s27, 1
        %s308 = scalar_select %p307, %s27, 1
        %s309 = smul.addr %s308, 8
        %s310 = scalar_lea.vmem %s1, %s309
        %p311 = pneg %p84
        %p312 = pneg %p81
        %p313 = scmp.lt.s32.totalorder %s27, 1
        %s314 = scalar_select %p313, %s27, 1
        %s315 = smul.addr %s314, 4
        %s316 = smul.addr %s315, 8
        %s317 = scalar_lea.vmem %s2, %s316
        %p318 = pneg %p110
        %p319 = pneg %p107
        %p320 = pneg %p131
        %p321 = pneg %p128
        %p322 = pneg %p152
        %p323 = pneg %p149
        %p324 = pneg %p173
        %p325 = pneg %p170
        %p326 = pneg %p194
        %p327 = pneg %p191
        %p328 = pneg %p222
        %p329 = pneg %p219
        %s330 = sand.u32 %s209, 1
        %s331 = scalar_lea.sflag [#allocation5], %s330
        %s332 = sand.u32 %s209, 1
        %s333 = smul.addr %s332, 8
        %s334 = scalar_lea.vmem [#allocation7], %s333
        %p335 = scmp.lt.s32.totalorder %s27, 1
        %s336 = scalar_select %p335, %s27, 1
        %p337 = scmp.lt.s32.totalorder %s28, 0
        %s338 = scalar_select %p337, %s28, 0
        %s339 = sadd.s32 %s338, %s336
        %s340 = smul.addr %s339, 8
        %s341 = scalar_lea.vmem %s0, %s340
        %p342 = scmp.lt.s32.totalorder %s27, 1
        %s343 = scalar_select %p342, %s27, 1
        %s344 = smul.addr %s343, 8
        %s345 = scalar_lea.vmem %s1, %s344
        %p346 = scmp.lt.s32.totalorder %s27, 1
        %s347 = scalar_select %p346, %s27, 1
        %s348 = smul.addr %s347, 4
        %s349 = smul.addr %s348, 8
        %s350 = scalar_lea.vmem %s2, %s349
        %v351 = vld [vmem:[%s341] sm:$0xff]
        %v352 = vld [vmem:[%s345] sm:$0xff]
        %v353 = vld [vmem:[%s350] sm:$0xff]
        %v354 = vld [vmem:[%s350 + $0x8] sm:$0xff]
        %v355 = vld [vmem:[%s350 + $0x10] sm:$0xff]
        %v356 = vld [vmem:[%s350 + $0x18] sm:$0xff]
        %v357 = vld [vmem:[%s3] sm:$0xff]
        %v358 = vld [vmem:[%s3 + $0x8] sm:$0xff]
        %v359 = vld [vmem:[%s4] sm:$0x1]
        %v361 = vlaneseq
        %v362 = vshrl.u32 %v361, 7
        %v363 = vsub.s32 0, %v362
        %v364 = vrot.slane %v359, %v363
        %vm366 = vcmask 130048
        %v368 = vsel %vm366, %v351, 0
        %370 = vmatprep.subr.mxu0 0.0
        %371 = vmatpush1.msra.mxu0 0.0
        %372 = vmatprep.subr.mxu0 0.0
        %373 = vmatpush1.msra.mxu0 0.0
        %374 = vmatprep.subr.mxu0 0.0
        %375 = vmatpush1.msra.mxu0 0.0
        %376 = vmatprep.subr.mxu0 0.0
        %377 = vmatpush1.msra.mxu0 0.0
        %378 = vmatprep.subr.mxu0 0.0
        %379 = vmatpush1.msra.mxu0 0.0
        %380 = vmatprep.subr.mxu0 0.0
        %381 = vmatpush1.msra.mxu0 0.0
        %382 = vmatprep.subr.mxu0 0.0
        %383 = vmatpush1.msra.mxu0 0.0
        %384 = vmatprep.subr.mxu0 0.0
        %385 = vmatpush1.msra.mxu0 0.0
        %386 = vmatprep.subr.mxu0 0.0
        %387 = vmatpush1.msra.mxu0 0.0
        %388 = vmatprep.subr.mxu0 0.0
        %389 = vmatpush1.msra.mxu0 0.0
        %390 = vmatprep.subr.mxu0 0.0
        %391 = vmatpush1.msra.mxu0 0.0
        %392 = vmatprep.subr.mxu0 0.0
        %393 = vmatpush1.msra.mxu0 0.0
        %394 = vmatprep.subr.mxu0 0.0
        %395 = vmatpush1.msra.mxu0 0.0
        %396 = vmatprep.subr.mxu0 0.0
        %397 = vmatpush1.msra.mxu0 0.0
        %398 = vmatprep.subr.mxu0 0.0
        %399 = vmatpush1.msra.mxu0 %v358
        %400 = vmatprep.subr.mxu0 0.0
        %401 = vmatpush1.msra.mxu0 %v357
        %402 = vmatprep.subr.mxu0 0.0
        %403 = vmatpush2.msra.mxu0 0.0
        %404 = vmatprep.subr.mxu0 0.0
        %405 = vmatpush2.msra.mxu0 0.0
        %406 = vmatprep.subr.mxu0 0.0
        %407 = vmatpush2.msra.mxu0 0.0
        %408 = vmatprep.subr.mxu0 0.0
        %409 = vmatpush2.msra.mxu0 0.0
        %410 = vmatprep.subr.mxu0 0.0
        %411 = vmatpush2.msra.mxu0 0.0
        %412 = vmatprep.subr.mxu0 0.0
        %413 = vmatpush2.msra.mxu0 0.0
        %414 = vmatprep.subr.mxu0 0.0
        %415 = vmatpush2.msra.mxu0 0.0
        %416 = vmatprep.subr.mxu0 0.0
        %417 = vmatpush2.msra.mxu0 0.0
        %418 = vmatprep.subr.mxu0 0.0
        %419 = vmatpush2.msra.mxu0 0.0
        %420 = vmatprep.subr.mxu0 0.0
        %421 = vmatpush2.msra.mxu0 0.0
        %422 = vmatprep.subr.mxu0 0.0
        %423 = vmatpush2.msra.mxu0 0.0
        %424 = vmatprep.subr.mxu0 0.0
        %425 = vmatpush2.msra.mxu0 0.0
        %426 = vmatprep.subr.mxu0 0.0
        %427 = vmatpush2.msra.mxu0 0.0
        %428 = vmatprep.subr.mxu0 0.0
        %429 = vmatpush2.msra.mxu0 0.0
        %430 = vmatprep.subr.mxu0 0.0
        %431 = vmatpush2.msra.mxu0 0.0
        %432 = vmatprep.subr.mxu0 0.0
        %433 = vmatpush2.msra.mxu0 0.0
        %434 = vmatprep.mubr.f32.mxu0 0.0
        %435 = vmatmul.mubr.f32.gmra.mxu0 %v368
        %v436 = vpop.f32.mrf.mxu0
        %v437 = vadd.f32 %v364, %v436
        %v438 = vpop.f32.mrf.mxu0
        %439 = vdwg.mxu0
        %s440 = sld [smem:[#allocation3]]
        %442 = vset.pattern.permute.xlu0 0
        %443 = vperm.xlu0 %442, %v437
        %v444 = vpop.permute.xlu0 %443
        %v446 = vlaneseq
        %v447 = vshrl.u32 %v446, 7
        %v448 = vsub.s32 0, %v447
        %v449 = vrot.slane %v353, %v448
        %v450 = vadd.f32 %v444, %v449
        %v451 = vtanh.pop %v450
        %s452 = sld [smem:[#allocation4]]
        %v453 = vstv %s452
        %v454 = vmul.f32 %v453, %v451
        %v455 = vadd.f32 %v454, 0.0
        %456 = vset.pattern.permute.xlu0 1
        %457 = vperm.xlu0 %456, %v437
        %v458 = vpop.permute.xlu0 %457
        %v460 = vlaneseq
        %v461 = vshrl.u32 %v460, 7
        %v462 = vsub.s32 1, %v461
        %v463 = vrot.slane %v353, %v462
        %v464 = vadd.f32 %v458, %v463
        %v465 = vtanh.pop %v464
        %s466 = sld [smem:[#allocation4 + $0x1]]
        %v467 = vstv %s466
        %v468 = vmul.f32 %v467, %v465
        %v469 = vadd.f32 %v455, %v468
        %470 = vset.pattern.permute.xlu0 2
        %471 = vperm.xlu0 %470, %v437
        %v472 = vpop.permute.xlu0 %471
        %v474 = vlaneseq
        %v475 = vshrl.u32 %v474, 7
        %v476 = vsub.s32 2, %v475
        %v477 = vrot.slane %v353, %v476
        %v478 = vadd.f32 %v472, %v477
        %v479 = vtanh.pop %v478
        %s480 = sld [smem:[#allocation4 + $0x2]]
        %v481 = vstv %s480
        %v482 = vmul.f32 %v481, %v479
        %v483 = vadd.f32 %v469, %v482
        %484 = vset.pattern.permute.xlu0 3
        %485 = vperm.xlu0 %484, %v437
        %v486 = vpop.permute.xlu0 %485
        %v488 = vlaneseq
        %v489 = vshrl.u32 %v488, 7
        %v490 = vsub.s32 3, %v489
        %v491 = vrot.slane %v353, %v490
        %v492 = vadd.f32 %v486, %v491
        %v493 = vtanh.pop %v492
        %s494 = sld [smem:[#allocation4 + $0x3]]
        %v495 = vstv %s494
        %v496 = vmul.f32 %v495, %v493
        %v497 = vadd.f32 %v483, %v496
        %498 = vset.pattern.permute.xlu0 4
        %499 = vperm.xlu0 %498, %v437
        %v500 = vpop.permute.xlu0 %499
        %v502 = vlaneseq
        %v503 = vshrl.u32 %v502, 7
        %v504 = vsub.s32 4, %v503
        %v505 = vrot.slane %v353, %v504
        %v506 = vadd.f32 %v500, %v505
        %v507 = vtanh.pop %v506
        %s508 = sld [smem:[#allocation4 + $0x4]]
        %v509 = vstv %s508
        %v510 = vmul.f32 %v509, %v507
        %v511 = vadd.f32 %v497, %v510
        %512 = vset.pattern.permute.xlu0 5
        %513 = vperm.xlu0 %512, %v437
        %v514 = vpop.permute.xlu0 %513
        %v516 = vlaneseq
        %v517 = vshrl.u32 %v516, 7
        %v518 = vsub.s32 5, %v517
        %v519 = vrot.slane %v353, %v518
        %v520 = vadd.f32 %v514, %v519
        %v521 = vtanh.pop %v520
        %s522 = sld [smem:[#allocation4 + $0x5]]
        %v523 = vstv %s522
        %v524 = vmul.f32 %v523, %v521
        %v525 = vadd.f32 %v511, %v524
        %526 = vset.pattern.permute.xlu0 6
        %527 = vperm.xlu0 %526, %v437
        %v528 = vpop.permute.xlu0 %527
        %v530 = vlaneseq
        %v531 = vshrl.u32 %v530, 7
        %v532 = vsub.s32 6, %v531
        %v533 = vrot.slane %v353, %v532
        %v534 = vadd.f32 %v528, %v533
        %v535 = vtanh.pop %v534
        %s536 = sld [smem:[#allocation4 + $0x6]]
        %v537 = vstv %s536
        %v538 = vmul.f32 %v537, %v535
        %v539 = vadd.f32 %v525, %v538
        %540 = vset.pattern.permute.xlu0 7
        %541 = vperm.xlu0 %540, %v437
        %v542 = vpop.permute.xlu0 %541
        %v544 = vlaneseq
        %v545 = vshrl.u32 %v544, 7
        %v546 = vsub.s32 7, %v545
        %v547 = vrot.slane %v353, %v546
        %v548 = vadd.f32 %v542, %v547
        %v549 = vtanh.pop %v548
        %s550 = sld [smem:[#allocation4 + $0x7]]
        %v551 = vstv %s550
        %v552 = vmul.f32 %v551, %v549
        %v553 = vadd.f32 %v539, %v552
        %554 = vset.pattern.permute.xlu0 8
        %555 = vperm.xlu0 %554, %v437
        %v556 = vpop.permute.xlu0 %555
        %v558 = vlaneseq
        %v559 = vshrl.u32 %v558, 7
        %v560 = vsub.s32 0, %v559
        %v561 = vrot.slane %v354, %v560
        %v562 = vadd.f32 %v556, %v561
        %v563 = vtanh.pop %v562
        %s564 = sld [smem:[#allocation4 + $0x8]]
        %v565 = vstv %s564
        %v566 = vmul.f32 %v565, %v563
        %v567 = vadd.f32 %v553, %v566
        %568 = vset.pattern.permute.xlu0 9
        %569 = vperm.xlu0 %568, %v437
        %v570 = vpop.permute.xlu0 %569
        %v572 = vlaneseq
        %v573 = vshrl.u32 %v572, 7
        %v574 = vsub.s32 1, %v573
        %v575 = vrot.slane %v354, %v574
        %v576 = vadd.f32 %v570, %v575
        %v577 = vtanh.pop %v576
        %s578 = sld [smem:[#allocation4 + $0x9]]
        %v579 = vstv %s578
        %v580 = vmul.f32 %v579, %v577
        %v581 = vadd.f32 %v567, %v580
        %582 = vset.pattern.permute.xlu0 10
        %583 = vperm.xlu0 %582, %v437
        %v584 = vpop.permute.xlu0 %583
        %v586 = vlaneseq
        %v587 = vshrl.u32 %v586, 7
        %v588 = vsub.s32 2, %v587
        %v589 = vrot.slane %v354, %v588
        %v590 = vadd.f32 %v584, %v589
        %v591 = vtanh.pop %v590
        %s592 = sld [smem:[#allocation4 + $0xa]]
        %v593 = vstv %s592
        %v594 = vmul.f32 %v593, %v591
        %v595 = vadd.f32 %v581, %v594
        %596 = vset.pattern.permute.xlu0 11
        %597 = vperm.xlu0 %596, %v437
        %v598 = vpop.permute.xlu0 %597
        %v600 = vlaneseq
        %v601 = vshrl.u32 %v600, 7
        %v602 = vsub.s32 3, %v601
        %v603 = vrot.slane %v354, %v602
        %v604 = vadd.f32 %v598, %v603
        %v605 = vtanh.pop %v604
        %s606 = sld [smem:[#allocation4 + $0xb]]
        %v607 = vstv %s606
        %v608 = vmul.f32 %v607, %v605
        %v609 = vadd.f32 %v595, %v608
        %610 = vset.pattern.permute.xlu0 12
        %611 = vperm.xlu0 %610, %v437
        %v612 = vpop.permute.xlu0 %611
        %v614 = vlaneseq
        %v615 = vshrl.u32 %v614, 7
        %v616 = vsub.s32 4, %v615
        %v617 = vrot.slane %v354, %v616
        %v618 = vadd.f32 %v612, %v617
        %v619 = vtanh.pop %v618
        %s620 = sld [smem:[#allocation4 + $0xc]]
        %v621 = vstv %s620
        %v622 = vmul.f32 %v621, %v619
        %v623 = vadd.f32 %v609, %v622
        %624 = vset.pattern.permute.xlu0 13
        %625 = vperm.xlu0 %624, %v437
        %v626 = vpop.permute.xlu0 %625
        %v628 = vlaneseq
        %v629 = vshrl.u32 %v628, 7
        %v630 = vsub.s32 5, %v629
        %v631 = vrot.slane %v354, %v630
        %v632 = vadd.f32 %v626, %v631
        %v633 = vtanh.pop %v632
        %s634 = sld [smem:[#allocation4 + $0xd]]
        %v635 = vstv %s634
        %v636 = vmul.f32 %v635, %v633
        %v637 = vadd.f32 %v623, %v636
        %638 = vset.pattern.permute.xlu0 14
        %639 = vperm.xlu0 %638, %v437
        %v640 = vpop.permute.xlu0 %639
        %v642 = vlaneseq
        %v643 = vshrl.u32 %v642, 7
        %v644 = vsub.s32 6, %v643
        %v645 = vrot.slane %v354, %v644
        %v646 = vadd.f32 %v640, %v645
        %v647 = vtanh.pop %v646
        %s648 = sld [smem:[#allocation4 + $0xe]]
        %v649 = vstv %s648
        %v650 = vmul.f32 %v649, %v647
        %v651 = vadd.f32 %v637, %v650
        %652 = vset.pattern.permute.xlu0 15
        %653 = vperm.xlu0 %652, %v437
        %v654 = vpop.permute.xlu0 %653
        %v656 = vlaneseq
        %v657 = vshrl.u32 %v656, 7
        %v658 = vsub.s32 7, %v657
        %v659 = vrot.slane %v354, %v658
        %v660 = vadd.f32 %v654, %v659
        %v661 = vtanh.pop %v660
        %s662 = sld [smem:[#allocation4 + $0xf]]
        %v663 = vstv %s662
        %v664 = vmul.f32 %v663, %v661
        %v665 = vadd.f32 %v651, %v664
        %666 = vset.pattern.permute.xlu0 16
        %667 = vperm.xlu0 %666, %v437
        %v668 = vpop.permute.xlu0 %667
        %v670 = vlaneseq
        %v671 = vshrl.u32 %v670, 7
        %v672 = vsub.s32 0, %v671
        %v673 = vrot.slane %v355, %v672
        %v674 = vadd.f32 %v668, %v673
        %v675 = vtanh.pop %v674
        %s676 = sld [smem:[#allocation4 + $0x10]]
        %v677 = vstv %s676
        %v678 = vmul.f32 %v677, %v675
        %v679 = vadd.f32 %v665, %v678
        %680 = vset.pattern.permute.xlu0 17
        %681 = vperm.xlu0 %680, %v437
        %v682 = vpop.permute.xlu0 %681
        %v684 = vlaneseq
        %v685 = vshrl.u32 %v684, 7
        %v686 = vsub.s32 1, %v685
        %v687 = vrot.slane %v355, %v686
        %v688 = vadd.f32 %v682, %v687
        %v689 = vtanh.pop %v688
        %s690 = sld [smem:[#allocation4 + $0x11]]
        %v691 = vstv %s690
        %v692 = vmul.f32 %v691, %v689
        %v693 = vadd.f32 %v679, %v692
        %694 = vset.pattern.permute.xlu0 18
        %695 = vperm.xlu0 %694, %v437
        %v696 = vpop.permute.xlu0 %695
        %v698 = vlaneseq
        %v699 = vshrl.u32 %v698, 7
        %v700 = vsub.s32 2, %v699
        %v701 = vrot.slane %v355, %v700
        %v702 = vadd.f32 %v696, %v701
        %v703 = vtanh.pop %v702
        %s704 = sld [smem:[#allocation4 + $0x12]]
        %v705 = vstv %s704
        %v706 = vmul.f32 %v705, %v703
        %v707 = vadd.f32 %v693, %v706
        %708 = vset.pattern.permute.xlu0 19
        %709 = vperm.xlu0 %708, %v437
        %v710 = vpop.permute.xlu0 %709
        %v712 = vlaneseq
        %v713 = vshrl.u32 %v712, 7
        %v714 = vsub.s32 3, %v713
        %v715 = vrot.slane %v355, %v714
        %v716 = vadd.f32 %v710, %v715
        %v717 = vtanh.pop %v716
        %s718 = sld [smem:[#allocation4 + $0x13]]
        %v719 = vstv %s718
        %v720 = vmul.f32 %v719, %v717
        %v721 = vadd.f32 %v707, %v720
        %722 = vset.pattern.permute.xlu0 20
        %723 = vperm.xlu0 %722, %v437
        %v724 = vpop.permute.xlu0 %723
        %v726 = vlaneseq
        %v727 = vshrl.u32 %v726, 7
        %v728 = vsub.s32 4, %v727
        %v729 = vrot.slane %v355, %v728
        %v730 = vadd.f32 %v724, %v729
        %v731 = vtanh.pop %v730
        %s732 = sld [smem:[#allocation4 + $0x14]]
        %v733 = vstv %s732
        %v734 = vmul.f32 %v733, %v731
        %v735 = vadd.f32 %v721, %v734
        %736 = vset.pattern.permute.xlu0 21
        %737 = vperm.xlu0 %736, %v437
        %v738 = vpop.permute.xlu0 %737
        %v740 = vlaneseq
        %v741 = vshrl.u32 %v740, 7
        %v742 = vsub.s32 5, %v741
        %v743 = vrot.slane %v355, %v742
        %v744 = vadd.f32 %v738, %v743
        %v745 = vtanh.pop %v744
        %s746 = sld [smem:[#allocation4 + $0x15]]
        %v747 = vstv %s746
        %v748 = vmul.f32 %v747, %v745
        %v749 = vadd.f32 %v735, %v748
        %750 = vset.pattern.permute.xlu0 22
        %751 = vperm.xlu0 %750, %v437
        %v752 = vpop.permute.xlu0 %751
        %v754 = vlaneseq
        %v755 = vshrl.u32 %v754, 7
        %v756 = vsub.s32 6, %v755
        %v757 = vrot.slane %v355, %v756
        %v758 = vadd.f32 %v752, %v757
        %v759 = vtanh.pop %v758
        %s760 = sld [smem:[#allocation4 + $0x16]]
        %v761 = vstv %s760
        %v762 = vmul.f32 %v761, %v759
        %v763 = vadd.f32 %v749, %v762
        %764 = vset.pattern.permute.xlu0 23
        %765 = vperm.xlu0 %764, %v437
        %v766 = vpop.permute.xlu0 %765
        %v768 = vlaneseq
        %v769 = vshrl.u32 %v768, 7
        %v770 = vsub.s32 7, %v769
        %v771 = vrot.slane %v355, %v770
        %v772 = vadd.f32 %v766, %v771
        %v773 = vtanh.pop %v772
        %s774 = sld [smem:[#allocation4 + $0x17]]
        %v775 = vstv %s774
        %v776 = vmul.f32 %v775, %v773
        %v777 = vadd.f32 %v763, %v776
        %778 = vset.pattern.permute.xlu0 24
        %779 = vperm.xlu0 %778, %v437
        %v780 = vpop.permute.xlu0 %779
        %v782 = vlaneseq
        %v783 = vshrl.u32 %v782, 7
        %v784 = vsub.s32 0, %v783
        %v785 = vrot.slane %v356, %v784
        %v786 = vadd.f32 %v780, %v785
        %v787 = vtanh.pop %v786
        %s788 = sld [smem:[#allocation4 + $0x18]]
        %v789 = vstv %s788
        %v790 = vmul.f32 %v789, %v787
        %v791 = vadd.f32 %v777, %v790
        %792 = vset.pattern.permute.xlu0 25
        %793 = vperm.xlu0 %792, %v437
        %v794 = vpop.permute.xlu0 %793
        %v796 = vlaneseq
        %v797 = vshrl.u32 %v796, 7
        %v798 = vsub.s32 1, %v797
        %v799 = vrot.slane %v356, %v798
        %v800 = vadd.f32 %v794, %v799
        %v801 = vtanh.pop %v800
        %s802 = sld [smem:[#allocation4 + $0x19]]
        %v803 = vstv %s802
        %v804 = vmul.f32 %v803, %v801
        %v805 = vadd.f32 %v791, %v804
        %806 = vset.pattern.permute.xlu0 26
        %807 = vperm.xlu0 %806, %v437
        %v808 = vpop.permute.xlu0 %807
        %v810 = vlaneseq
        %v811 = vshrl.u32 %v810, 7
        %v812 = vsub.s32 2, %v811
        %v813 = vrot.slane %v356, %v812
        %v814 = vadd.f32 %v808, %v813
        %v815 = vtanh.pop %v814
        %s816 = sld [smem:[#allocation4 + $0x1a]]
        %v817 = vstv %s816
        %v818 = vmul.f32 %v817, %v815
        %v819 = vadd.f32 %v805, %v818
        %820 = vset.pattern.permute.xlu0 27
        %821 = vperm.xlu0 %820, %v437
        %v822 = vpop.permute.xlu0 %821
        %v824 = vlaneseq
        %v825 = vshrl.u32 %v824, 7
        %v826 = vsub.s32 3, %v825
        %v827 = vrot.slane %v356, %v826
        %v828 = vadd.f32 %v822, %v827
        %v829 = vtanh.pop %v828
        %s830 = sld [smem:[#allocation4 + $0x1b]]
        %v831 = vstv %s830
        %v832 = vmul.f32 %v831, %v829
        %v833 = vadd.f32 %v819, %v832
        %834 = vset.pattern.permute.xlu0 28
        %835 = vperm.xlu0 %834, %v437
        %v836 = vpop.permute.xlu0 %835
        %v838 = vlaneseq
        %v839 = vshrl.u32 %v838, 7
        %v840 = vsub.s32 4, %v839
        %v841 = vrot.slane %v356, %v840
        %v842 = vadd.f32 %v836, %v841
        %v843 = vtanh.pop %v842
        %s844 = sld [smem:[#allocation4 + $0x1c]]
        %v845 = vstv %s844
        %v846 = vmul.f32 %v845, %v843
        %v847 = vadd.f32 %v833, %v846
        %848 = vset.pattern.permute.xlu0 29
        %849 = vperm.xlu0 %848, %v437
        %v850 = vpop.permute.xlu0 %849
        %v852 = vlaneseq
        %v853 = vshrl.u32 %v852, 7
        %v854 = vsub.s32 5, %v853
        %v855 = vrot.slane %v356, %v854
        %v856 = vadd.f32 %v850, %v855
        %v857 = vtanh.pop %v856
        %s858 = sld [smem:[#allocation4 + $0x1d]]
        %v859 = vstv %s858
        %v860 = vmul.f32 %v859, %v857
        %v861 = vadd.f32 %v847, %v860
        %862 = vset.pattern.permute.xlu0 30
        %863 = vperm.xlu0 %862, %v437
        %v864 = vpop.permute.xlu0 %863
        %v866 = vlaneseq
        %v867 = vshrl.u32 %v866, 7
        %v868 = vsub.s32 6, %v867
        %v869 = vrot.slane %v356, %v868
        %v870 = vadd.f32 %v864, %v869
        %v871 = vtanh.pop %v870
        %s872 = sld [smem:[#allocation4 + $0x1e]]
        %v873 = vstv %s872
        %v874 = vmul.f32 %v873, %v871
        %v875 = vadd.f32 %v861, %v874
        %876 = vset.pattern.permute.xlu0 31
        %877 = vperm.xlu0 %876, %v437
        %v878 = vpop.permute.xlu0 %877
        %v880 = vlaneseq
        %v881 = vshrl.u32 %v880, 7
        %v882 = vsub.s32 7, %v881
        %v883 = vrot.slane %v356, %v882
        %v884 = vadd.f32 %v878, %v883
        %v885 = vtanh.pop %v884
        %s886 = sld [smem:[#allocation4 + $0x1f]]
        %v887 = vstv %s886
        %v888 = vmul.f32 %v887, %v885
        %v889 = vadd.f32 %v875, %v888
        %v890 = vstv %s440
        %v891 = vadd.f32 %v889, %v890
        %vm892 = vcmask 64512
        %893 = vst.msk [vmem:[#allocation2] sm:$0xff] %vm892, %v891
        %v894 = vld [vmem:[#allocation2] sm:$0xff]
        %v895 = vsel %vm892, %v894, -inf
        %896 = vmax.xlane.f32.xlu0 %v895
        %v897 = vpop.xlane.xlu0 %896
        %v898 = vsub.f32 %v894, %v897
        %v899 = vmul.f32 %v898, 1.442695
        %v900 = vpow.pop %v899
        %v901 = vsel %vm892, %v900, 0.0
        %902 = vadd.xlane.f32.xlu0 %v901
        %v903 = vpop.xlane.xlu0 %902
        %v905 = vsel %vm892, %v900, 0
        %907 = vmatprep.subr.mxu0 0.0
        %908 = vmatpush1.msra.mxu0 0.0
        %909 = vmatprep.subr.mxu0 0.0
        %910 = vmatpush1.msra.mxu0 0.0
        %911 = vmatprep.subr.mxu0 0.0
        %912 = vmatpush1.msra.mxu0 0.0
        %913 = vmatprep.subr.mxu0 0.0
        %914 = vmatpush1.msra.mxu0 0.0
        %915 = vmatprep.subr.mxu0 0.0
        %916 = vmatpush1.msra.mxu0 0.0
        %917 = vmatprep.subr.mxu0 0.0
        %918 = vmatpush1.msra.mxu0 0.0
        %919 = vmatprep.subr.mxu0 0.0
        %920 = vmatpush1.msra.mxu0 0.0
        %921 = vmatprep.subr.mxu0 0.0
        %922 = vmatpush1.msra.mxu0 0.0
        %923 = vmatprep.subr.mxu0 0.0
        %924 = vmatpush1.msra.mxu0 0.0
        %925 = vmatprep.subr.mxu0 0.0
        %926 = vmatpush1.msra.mxu0 0.0
        %927 = vmatprep.subr.mxu0 0.0
        %928 = vmatpush1.msra.mxu0 0.0
        %929 = vmatprep.subr.mxu0 0.0
        %930 = vmatpush1.msra.mxu0 0.0
        %931 = vmatprep.subr.mxu0 0.0
        %932 = vmatpush1.msra.mxu0 0.0
        %933 = vmatprep.subr.mxu0 0.0
        %934 = vmatpush1.msra.mxu0 0.0
        %935 = vmatprep.subr.mxu0 0.0
        %936 = vmatpush1.msra.mxu0 0.0
        %937 = vmatprep.subr.mxu0 0.0
        %938 = vmatpush1.msra.mxu0 %v352
        %939 = vmatprep.subr.mxu0 0.0
        %940 = vmatpush2.msra.mxu0 0.0
        %941 = vmatprep.subr.mxu0 0.0
        %942 = vmatpush2.msra.mxu0 0.0
        %943 = vmatprep.subr.mxu0 0.0
        %944 = vmatpush2.msra.mxu0 0.0
        %945 = vmatprep.subr.mxu0 0.0
        %946 = vmatpush2.msra.mxu0 0.0
        %947 = vmatprep.subr.mxu0 0.0
        %948 = vmatpush2.msra.mxu0 0.0
        %949 = vmatprep.subr.mxu0 0.0
        %950 = vmatpush2.msra.mxu0 0.0
        %951 = vmatprep.subr.mxu0 0.0
        %952 = vmatpush2.msra.mxu0 0.0
        %953 = vmatprep.subr.mxu0 0.0
        %954 = vmatpush2.msra.mxu0 0.0
        %955 = vmatprep.subr.mxu0 0.0
        %956 = vmatpush2.msra.mxu0 0.0
        %957 = vmatprep.subr.mxu0 0.0
        %958 = vmatpush2.msra.mxu0 0.0
        %959 = vmatprep.subr.mxu0 0.0
        %960 = vmatpush2.msra.mxu0 0.0
        %961 = vmatprep.subr.mxu0 0.0
        %962 = vmatpush2.msra.mxu0 0.0
        %963 = vmatprep.subr.mxu0 0.0
        %964 = vmatpush2.msra.mxu0 0.0
        %965 = vmatprep.subr.mxu0 0.0
        %966 = vmatpush2.msra.mxu0 0.0
        %967 = vmatprep.subr.mxu0 0.0
        %968 = vmatpush2.msra.mxu0 0.0
        %969 = vmatprep.subr.mxu0 0.0
        %970 = vmatpush2.msra.mxu0 0.0
        %971 = vmatprep.mubr.f32.mxu0 0.0
        %972 = vmatmul.mubr.f32.gmra.mxu0 %v905
        %v973 = vpop.f32.mrf.mxu0
        %v974 = vadd.f32 0.0, %v973
        %v975 = vpop.f32.mrf.mxu0
        %976 = vdwg.mxu0
        %v977 = vrcp.pop %v903
        %v978 = vmul.f32 1.0, %v977
        %v979 = vmul.f32 %v974, %v978
        %980 = vst [vmem:[%s334] sm:$0xff] %v979
        %s981 = sand.u32 %s209, 1
        %s982 = scalar_lea.sflag [#allocation5], %s981
        %s983 = sand.u32 %s209, 1
        %s984 = smul.addr %s983, 8
        %s985 = scalar_lea.vmem [#allocation7], %s984
        // Predicated region
        $region53: #{tpu_custom_call.1} parent=47 // pred_check
          %p986 = pneg %p219
        $region54: #{tpu_custom_call.1} parent=47 // pred_check_branch
          %988 = sbr.rel (%p986) target = $region56
        $region55: #{tpu_custom_call.1} parent=47 // pred_region
          %s990 = ssub.s32 128, 128
          %991 = vsyncadd %s982, %s990
          %s992 = sadd.s32 %s28, %s27
          %s993 = smul.addr %s992, 128
          %s994 = scalar_lea.hbm %s7, %s993
          %s996 = sshll.u32 %s985, 4
          %s997 = int_to_ptr.vmem [resolvable:$true] %s996
          %999 = dma.vmem_to_hbm [thread:$0]  %s997, 128, %s994, %s982
        $region56: #{tpu_custom_call.1} parent=47 // pred_fallthru
          _
      $region48: #{tpu_custom_call.1} parent=5 // pred_fallthru
        _
      %p1000 = scmp.le.s32.totalorder 2, %s18
      // Predicated region
      $region57: #{tpu_custom_call.1} parent=5 // pred_check
        %p1001 = pneg %p1000
      $region58: #{tpu_custom_call.1} parent=5 // pred_check_branch
        %1003 = sbr.rel (%p1001) target = $region60
      $region59: #{tpu_custom_call.1} parent=5 // pred_region
        %s1004 = ssub.s32 %s18, 2
        // Predicated region
        $region61: #{tpu_custom_call.1} parent=59 // pred_check
          %p1005 = pneg %p225
        $region62: #{tpu_custom_call.1} parent=59 // pred_check_branch
          %1007 = sbr.rel (%p1005) target = $region64
        $region63: #{tpu_custom_call.1} parent=59 // pred_region
          %s1008 = sand.u32 %s210, 1
          %s1009 = scalar_lea.sflag [#allocation5], %s1008
          %s1010 = sand.u32 %s210, 1
          %s1011 = smul.addr %s1010, 8
          %s1012 = scalar_lea.vmem [#allocation7], %s1011
          %1013 = dma.done %s1009, 128
        $region64: #{tpu_custom_call.1} parent=59 // pred_fallthru
          _
      $region60: #{tpu_custom_call.1} parent=5 // pred_fallthru
        _
    $region6: #{tpu_custom_call.1} parent=1 // loop_footer
      %s22 = sadd.s32 1, %s18
    $region7: #{tpu_custom_call.1} parent=1 // loop_footer_branch
      %17 = sbr.rel target = $region3
    $region8: #{tpu_custom_call.1} parent=1 // loop_exit
      _
    %1014 = vsyncpa [#allocation5], 1
    %s1015 = scalar_lea.sflag [#allocation5], 1
    %1016 = vsyncpa %s1015, 1
    %1017 = vsyncpa [#allocation6], 1
    %s1018 = scalar_lea.sflag [#allocation6], 1
    %1019 = vsyncpa %s1018, 1

</llo_original>
